<compile_context>
chip_gen: v5e
topology: v5e:2x2
jax: 0.10.0
libtpu: 0.0.40
codegen_flags: <defaults>
</compile_context>

<pallas_src>
import functools
import math

import numpy as np
import jax
import jax.numpy as jnp
from jax import lax
from jax.experimental import pallas as pl
from jax.experimental.pallas import tpu as pltpu

# ---- hyper-parameters (Discritizer / MeanshiftCluster_2.__init__) ----
SRADIUS = 2                      # cand_parameters['mf_sradius']  (small for the test)
RRADIUS = 0.5                    # cand_parameters['mf_rradius']
NUM_ITER = 4                     # MeanshiftCluster_2 default
RSIGMA = RRADIUS / 3.0
SQRT_2PI = math.sqrt(2.0 * math.pi)
GAUSS_NORM = 1.0 / (RSIGMA * SQRT_2PI)
EXP_C = -0.5 / (RSIGMA * RSIGMA)          # exp argument: diff*diff*EXP_C (fused constant)
W_THR = RRADIUS / GAUSS_NORM              # threshold on the *unnormalized* gaussian weight

CAND_PARAMS = {
    'bg_thr': 0.3, 'a2p_ratio_thr': 1.8, 'a2p_pm_thr': 15,
    'num_keep': 100,             # cand_parameters['mf_num_keep']
    'size_thr': 5,               # cand_parameters['mf_size_thr']
}

# no learned parameters: nei_kernel / rng_kernel are deterministic one-hot "pick the k-th
# neighbor" conv kernels, realized here as an unrolled neighbor loop over rolls.


# -------------------------- Pallas kernel (hot path) --------------------------

def _meanshift_kernel(x_ref, mf_ref, lbl_ref, xbuf, *, ht, wd, ht_p, wd_p, bt):
    """ReLU + NUM_ITER meanshift iterations + label discretization.

    The block is a stacked 2-D slab of `bt` images, each occupying ht_p rows (ht true rows
    + pad) by wd_p lanes (wd true cols + pad).  Replication padding is baked into the pad
    region each iteration, so a cyclic pltpu.roll yields clamped neighbors for true pixels.
    Requires ht_p - ht >= 2*SRADIUS and wd_p - wd >= 2*SRADIUS (guaranteed by the wrapper).
    """
    r = SRADIUS
    n_rows = bt * ht_p

    # nn.ReLU(); state lives in VMEM scratch across iterations (no big fori_loop carry).
    xbuf[...] = jnp.maximum(x_ref[...], 0.0)

    def one_iter(_, carry):
        # ---- bake replication padding into the pad region (cols first, then rows) ----
        # cols [wd, wd+r)       <- col wd-1   (right edge, all rows)
        # cols [wd_p-r, wd_p)   <- col 0      (left edge, read via cyclic lane roll)
        xbuf[:, pl.ds(wd, r)] = jnp.broadcast_to(xbuf[:, wd - 1:wd], (n_rows, r))
        xbuf[:, pl.ds(wd_p - r, r)] = jnp.broadcast_to(xbuf[:, 0:1], (n_rows, r))
        for b in range(bt):
            base = b * ht_p
            # bottom replicate for image b: rows [base+ht, base+ht+r) <- row base+ht-1
            xbuf[pl.ds(base + ht, r), :] = jnp.broadcast_to(
                xbuf[base + ht - 1:base + ht, :], (r, wd_p))
            # top replicate for image b lands in the tail of the previous block (cyclic
            # sublane roll reads it there): rows [(base-r) % n_rows, ...) <- row base
            top_dst = (base - r) % n_rows
            xbuf[pl.ds(top_dst, r), :] = jnp.broadcast_to(
                xbuf[base:base + 1, :], (r, wd_p))

        x = xbuf[...]
        # Center tap (dy==0, dx==0): w == 1 exactly (1 >= W_THR so the soft threshold never
        # fires) -> skip the exp/threshold chain and seed the accumulators directly.
        num = x
        den = jnp.ones_like(x)
        for dy in range(-r, r + 1):                      # sublane shift, hoisted
            xv = x if dy == 0 else pltpu.roll(x, (-dy) % n_rows, 0)
            for dx in range(-r, r + 1):                  # lane shift
                if dy == 0 and dx == 0:
                    continue
                # nei[i, j] == x[clamp(i + dy), clamp(j + dx)] (replication pad via bake)
                nei = xv if dx == 0 else pltpu.roll(xv, (-dx) % wd_p, 1)
                # rng_diff == compute_pairwise_conv(x, rng_kernel)[k] == x - nei
                diff = x - nei
                # gaussian(diff, rsigma) with the 1/(sigma*sqrt(2pi)) factor folded out
                # (cancels in num/den); threshold rescaled accordingly.
                w = jnp.exp(diff * diff * EXP_C)
                # rng_wght = rng_wght - (rng_wght < rradius) * rng_wght * 0.9
                w = jnp.where(w < W_THR, w * 0.1, w)
                num = num + w * nei
                den = den + w
        xbuf[...] = num / den        # den >= 1 (center tap contributes exactly 1)
        return carry

    lax.fori_loop(0, NUM_ITER, one_iter, 0)

    x = xbuf[...]
    mf_ref[...] = x
    # labelImgs = torch.round(mf_fea / (rradius + 0.01)).int()
    lbl_ref[...] = jnp.round(x / (RRADIUS + 0.01)).astype(jnp.int32)


def meanshift_pallas(preds):
    """preds: (bs, 1, ht, wd) f32 -> (mf (bs,ht,wd) f32, labels (bs,ht,wd) i32)."""
    bs, _, ht, wd = preds.shape
    r = SRADIUS
    # Pad so the roll-based replication bake has room (>= 2r slack) and the layout is
    # sublane/lane aligned (lane-dense output -> unmasked vst).
    ht_p = ((ht + 2 * r + 7) // 8) * 8
    wd_p = ((wd + 2 * r + 127) // 128) * 128

    try:
        vmem_cap = int(pltpu.get_tpu_info().vmem_capacity_bytes)
    except Exception:  # pragma: no cover - conservative fallback (v7x per-core VMEM)
        vmem_cap = 64 * 1024 * 1024

    per_img = ht_p * wd_p * 4
    # Per grid step: (1 in + 2 out) double-buffered = 6 tiles + 1 scratch + ~12 live
    # full-tile temporaries in the unrolled 24-neighbor body  ->  ~20 tiles budget.
    bt_vmem = max(1, int(0.6 * vmem_cap) // (20 * per_img))
    bt_cores = max(1, bs // 2)          # keep >= 2 parallel grid steps for v7x's 2 TCs
    bt = int(min(8, bt_vmem, bt_cores, bs))
    bs_pad = ((bs + bt - 1) // bt) * bt
    grid = bs_pad // bt
    rows = bt * ht_p

    x = preds.reshape(bs, ht, wd).astype(jnp.float32)
    x = jnp.pad(x, ((0, bs_pad - bs), (0, ht_p - ht), (0, wd_p - wd)))
    x = x.reshape(bs_pad * ht_p, wd_p)          # stacked lane-dense 2-D slab

    kern = functools.partial(_meanshift_kernel, ht=ht, wd=wd, ht_p=ht_p, wd_p=wd_p, bt=bt)
    blk = pl.BlockSpec((rows, wd_p), lambda b: (b, 0))
    vmem_limit = int(min(max(vmem_cap - 8 * 1024 * 1024, 16 * 1024 * 1024),
                         max(16 * 1024 * 1024, 20 * rows * wd_p * 4)))
    # TODO(synk): very large single images need a row-tiled grid with a NUM_ITER*SRADIUS
    # halo (or per-iteration passes) instead of whole-image blocks.

    mf, lbl = pl.pallas_call(
        kern,
        out_shape=(jax.ShapeDtypeStruct((bs_pad * ht_p, wd_p), jnp.float32),
                   jax.ShapeDtypeStruct((bs_pad * ht_p, wd_p), jnp.int32)),
        grid_spec=pltpu.PrefetchScalarGridSpec(
            num_scalar_prefetch=0,
            grid=(grid,),
            in_specs=[blk],
            out_specs=[blk, blk],
            scratch_shapes=[pltpu.VMEM((rows, wd_p), jnp.float32)]),
        compiler_params=pltpu.CompilerParams(
            dimension_semantics=("parallel",),
            vmem_limit_bytes=vmem_limit),
    )(x)

    mf = mf.reshape(bs_pad, ht_p, wd_p)[:bs, :ht, :wd]
    lbl = lbl.reshape(bs_pad, ht_p, wd_p)[:bs, :ht, :wd]
    return mf, lbl


# ---------------- host-side glue (data-dependent candidate extraction) ----------------
# TODO(synk): extract_candidates / merge_disconnected_regions have dynamic, data-dependent
# region counts and Python-loop merging; they stay on host in numpy (exact port of torch).

def _extract_candidates_host(label_imgs, intensity_imgs, ht, wd, cand_params, merge_thr):
    bg_thr = cand_params['bg_thr']
    size_thr = cand_params['size_thr']
    num_keep = cand_params['num_keep']
    bs = label_imgs.shape[0]
    axis_x = np.tile(np.arange(wd, dtype=np.float32)[None, :], (ht, 1)).reshape(1, -1)
    axis_y = np.tile(np.arange(ht, dtype=np.float32)[:, None], (1, wd)).reshape(1, -1)

    masks, bboxes = [], []
    for bk in range(bs):
        intensityI = intensity_imgs[bk]               # (1, ht*wd)
        labelI = label_imgs[bk]                       # (ht*wd,)
        N = int(labelI.max()) + 1
        onehot = (labelI[None, :] == np.arange(N)[:, None]).astype(np.float32)
        area = onehot.sum(-1)
        mean_intensity = (onehot * intensityI).sum(-1) / (area + 1)
        keep = (mean_intensity > bg_thr) & (area > size_thr)

        # merge_disconnected_regions
        diff = np.abs(mean_intensity[:, None] - mean_intensity[None, :])
        merge = diff < merge_thr
        merge_idxes, new_masks = [], []
        for i in range(N):
            if not keep[i]:
                continue
            new_masks.append(onehot[i:i + 1, :])
            if merge[i].sum() == 1:
                continue
            flag = True
            if len(merge_idxes) > 0:
                siml = np.logical_xor(merge[i][None, :], merge[merge_idxes]).sum(axis=-1)
                flag = False if bool((siml == 0).any()) else True
            if flag:
                merge_idxes.append(i)
                new_mask = (onehot[merge[i]].sum(axis=0) > 0).astype(np.float32)
                new_masks.append(new_mask[None, :])

        if len(new_masks) == 0:
            cur_bboxes = np.array([[bk, 0, 0, 2, 2, 0, 0.0]], dtype=np.float32)
            onehot_out = np.zeros((1, ht, wd), dtype=np.float32)
        else:
            oh = np.concatenate(new_masks, axis=0)
            area = oh.sum(-1)
            if oh.shape[0] > num_keep:
                idxes = np.argsort(-area, kind='stable')[:num_keep]   # torch.topk
                oh = oh[idxes]
                area = area[idxes]
            mi = (oh * intensityI).sum(-1) / (area + 1)
            M = oh.shape[0]
            bth_idx = np.full((M,), float(bk), dtype=np.float32)
            int_label = np.arange(M, dtype=np.float32)
            xa = oh * axis_x
            ya = oh * axis_y
            x1 = xa.max(-1)
            y1 = ya.max(-1)
            xa = np.where(oh == 0, float(wd), xa)
            ya = np.where(oh == 0, float(ht), ya)
            x0 = xa.min(-1)
            y0 = ya.min(-1)
            cur_bboxes = np.stack([bth_idx, x0, y0, x1, y1, int_label, mi], axis=1).astype(np.float32)
            onehot_out = oh.reshape(-1, ht, wd)
        bboxes.append(cur_bboxes)
        masks.append(onehot_out)
    return masks, bboxes


def _extend_bboxes_host(bboxes, ht, wd, scale=0.2, max_ext=(16, 16), minbox=(8, 8)):
    x0, y0, x1, y1 = bboxes[:, 0], bboxes[:, 1], bboxes[:, 2], bboxes[:, 3]
    cx, cy = (x0 + x1) / 2.0, (y0 + y1) / 2.0
    bht, bwd = y1 - y0 + 1, x1 - x0 + 1
    bht = np.clip(bht + np.minimum(bht * scale, max_ext[0]), minbox[0], ht)
    bwd = np.clip(bwd + np.minimum(bwd * scale, max_ext[1]), minbox[1], wd)
    pht, pwd = bht, bwd
    ext_x0 = np.maximum(cx - pwd / 2.0, 0.0)
    ext_x0 = np.minimum(ext_x0, wd - pwd)
    ext_x1 = ext_x0 + pwd - 1
    ext_y0 = np.maximum(cy - pht / 2.0, 0.0)
    ext_y0 = np.minimum(ext_y0, ht - pht)
    ext_y1 = ext_y0 + pht - 1
    return np.stack([ext_x0.astype(np.int32), ext_y0.astype(np.int32),
                     ext_x1.astype(np.int32), ext_y1.astype(np.int32)], axis=1)


def discritizer_forward(preds):
    """preds: (bs, 1, ht, wd) float32. Returns {'mask': [np (N,ht,wd)], 'bboxes': np (T,7)}."""
    bs, _, ht, wd = preds.shape
    mf_fea, label_imgs = meanshift_pallas(preds)                     # Pallas hot path
    mf_fea, label_imgs = jax.block_until_ready((mf_fea, label_imgs))

    label_np = np.asarray(label_imgs).reshape(bs, -1)
    # intensity = ReLU(preds): trivial host recompute on data the host already has
    # (saves a full output stream / double-buffer in the kernel, per perf review).
    intensity_np = np.maximum(np.asarray(preds, dtype=np.float32), 0.0).reshape(bs, 1, -1)

    masks, bbox_list = _extract_candidates_host(
        label_np, intensity_np, ht, wd, CAND_PARAMS, merge_thr=RRADIUS)
    bboxes = np.concatenate(bbox_list, axis=0)
    bboxes[:, 1:5] = _extend_bboxes_host(bboxes[:, 1:5], ht, wd).astype(np.float32)
    return {'mask': masks, 'bboxes': bboxes, 'mf_fea': np.asarray(mf_fea)}


if __name__ == "__main__":
    key = jax.random.PRNGKey(0)
    bs, ht, wd = 2, 16, 16
    preds = jax.random.uniform(key, (bs, 1, ht, wd), dtype=jnp.float32,
                               minval=-0.5, maxval=1.5)
    out = discritizer_forward(preds)
    # sanity on output structure / values
    assert out['bboxes'].shape[1] == 7
    assert len(out['mask']) == bs
    assert out['mf_fea'].shape == (bs, ht, wd)
    assert np.isfinite(out['mf_fea']).all()
    print("KERNEL_OK")
</pallas_src>

<mosaic_0001>
module attributes {stable_mosaic.version = 11 : i64} {
  func.func @_meanshift_kernel(%arg0: i32, %arg1: memref<24x128xf32, #tpu.memory_space<vmem>>, %arg2: memref<24x128xf32, #tpu.memory_space<vmem>>, %arg3: memref<24x128xi32, #tpu.memory_space<vmem>>, %arg4: memref<24x128xf32, #tpu.memory_space<vmem>>) attributes {dimension_semantics = [#tpu.dimension_semantics<parallel>], iteration_bounds = array<i64: 2>, scalar_prefetch = 0 : i64, scratch_operands = 1 : i64, tpu.core_type = #tpu.core_type<tc>, window_params = [{transform_indices = @transform_0, window_bounds = array<i64: 24, 128>}, {transform_indices = @transform_1, window_bounds = array<i64: 24, 128>}, {transform_indices = @transform_2, window_bounds = array<i64: 24, 128>}]} {
    %c0 = arith.constant 0 : index
    %c0_0 = arith.constant 0 : index
    %0 = vector.load %arg1[%c0, %c0_0] : memref<24x128xf32, #tpu.memory_space<vmem>>, vector<24x128xf32>
    %cst = arith.constant 0.000000e+00 : f32
    %1 = vector.broadcast %cst : f32 to vector<24x128xf32>
    %2 = arith.maximumf %0, %1 : vector<24x128xf32>
    %c0_1 = arith.constant 0 : index
    %c0_2 = arith.constant 0 : index
    %3 = vector.load %arg4[%c0_1, %c0_2] : memref<24x128xf32, #tpu.memory_space<vmem>>, vector<24x128xf32>
    tpu.vector_store %arg4[%c0_1, %c0_2], %2 {strides = array<i32>} : memref<24x128xf32, #tpu.memory_space<vmem>>, vector<24x128xf32>,
    %c0_i32 = arith.constant 0 : i32
    %c4_i32 = arith.constant 4 : i32
    %4 = arith.addi %c0_i32, %c4_i32 : i32
    %c1_i32 = arith.constant 1 : i32
    scf.for %arg5 = %c0_i32 to %4 step %c1_i32  : i32 {
      %c0_10 = arith.constant 0 : index
      %c15 = arith.constant 15 : index
      %12 = vector.load %arg4[%c0_10, %c15] : memref<24x128xf32, #tpu.memory_space<vmem>>, vector<24x1xf32>
      %13 = vector.shape_cast %12 : vector<24x1xf32> to vector<24x1xf32>
      %14 = vector.broadcast %13 : vector<24x1xf32> to vector<24x2xf32>
      %c0_11 = arith.constant 0 : index
      %c16 = arith.constant 16 : index
      %15 = vector.load %arg4[%c0_11, %c16] : memref<24x128xf32, #tpu.memory_space<vmem>>, vector<24x2xf32>
      tpu.vector_store %arg4[%c0_11, %c16], %14 {strides = array<i32>} : memref<24x128xf32, #tpu.memory_space<vmem>>, vector<24x2xf32>,
      %c0_12 = arith.constant 0 : index
      %c0_13 = arith.constant 0 : index
      %16 = vector.load %arg4[%c0_12, %c0_13] : memref<24x128xf32, #tpu.memory_space<vmem>>, vector<24x1xf32>
      %17 = vector.shape_cast %16 : vector<24x1xf32> to vector<24x1xf32>
      %18 = vector.broadcast %17 : vector<24x1xf32> to vector<24x2xf32>
      %c0_14 = arith.constant 0 : index
      %c126 = arith.constant 126 : index
      %19 = vector.load %arg4[%c0_14, %c126] : memref<24x128xf32, #tpu.memory_space<vmem>>, vector<24x2xf32>
      tpu.vector_store %arg4[%c0_14, %c126], %18 {strides = array<i32>} : memref<24x128xf32, #tpu.memory_space<vmem>>, vector<24x2xf32>,
      %c15_15 = arith.constant 15 : index
      %c0_16 = arith.constant 0 : index
      %20 = vector.load %arg4[%c15_15, %c0_16] : memref<24x128xf32, #tpu.memory_space<vmem>>, vector<1x128xf32>
      %21 = vector.shape_cast %20 : vector<1x128xf32> to vector<1x128xf32>
      %22 = vector.broadcast %21 : vector<1x128xf32> to vector<2x128xf32>
      %c16_17 = arith.constant 16 : index
      %c0_18 = arith.constant 0 : index
      %23 = vector.load %arg4[%c16_17, %c0_18] : memref<24x128xf32, #tpu.memory_space<vmem>>, vector<2x128xf32>
      tpu.vector_store %arg4[%c16_17, %c0_18], %22 {strides = array<i32>} : memref<24x128xf32, #tpu.memory_space<vmem>>, vector<2x128xf32>,
      %c0_19 = arith.constant 0 : index
      %c0_20 = arith.constant 0 : index
      %24 = vector.load %arg4[%c0_19, %c0_20] : memref<24x128xf32, #tpu.memory_space<vmem>>, vector<1x128xf32>
      %25 = vector.shape_cast %24 : vector<1x128xf32> to vector<1x128xf32>
      %26 = vector.broadcast %25 : vector<1x128xf32> to vector<2x128xf32>
      %c22 = arith.constant 22 : index
      %c0_21 = arith.constant 0 : index
      %27 = vector.load %arg4[%c22, %c0_21] : memref<24x128xf32, #tpu.memory_space<vmem>>, vector<2x128xf32>
      tpu.vector_store %arg4[%c22, %c0_21], %26 {strides = array<i32>} : memref<24x128xf32, #tpu.memory_space<vmem>>, vector<2x128xf32>,
      %c0_22 = arith.constant 0 : index
      %c0_23 = arith.constant 0 : index
      %28 = vector.load %arg4[%c0_22, %c0_23] : memref<24x128xf32, #tpu.memory_space<vmem>>, vector<24x128xf32>
      %cst_24 = arith.constant 1.000000e+00 : f32
      %29 = vector.broadcast %cst_24 : f32 to vector<24x128xf32>
      %c2_i32 = arith.constant 2 : i32
      %30 = tpu.dynamic_rotate %28 by %c2_i32 dim 0 : vector<24x128xf32>, i32 -> vector<24x128xf32>
      %c2_i32_25 = arith.constant 2 : i32
      %31 = tpu.dynamic_rotate %30 by %c2_i32_25 dim 1 : vector<24x128xf32>, i32 -> vector<24x128xf32>
      %32 = arith.subf %28, %31 : vector<24x128xf32>
      %33 = arith.mulf %32, %32 : vector<24x128xf32>
      %cst_26 = arith.constant -1.800000e+01 : f32
      %34 = vector.broadcast %cst_26 : f32 to vector<24x128xf32>
      %35 = arith.mulf %33, %34 : vector<24x128xf32>
      %36 = math.exp %35 : vector<24x128xf32>
      %cst_27 = arith.constant 0.208885685 : f32
      %37 = vector.broadcast %cst_27 : f32 to vector<24x128xf32>
      %38 = arith.cmpf olt, %36, %37 : vector<24x128xf32>
      %cst_28 = arith.constant 1.000000e-01 : f32
      %39 = vector.broadcast %cst_28 : f32 to vector<24x128xf32>
      %40 = arith.mulf %36, %39 : vector<24x128xf32>
      %41 = arith.select %38, %40, %36 : vector<24x128xi1>, vector<24x128xf32>
      %42 = arith.mulf %41, %31 : vector<24x128xf32>
      %43 = arith.addf %28, %42 : vector<24x128xf32>
      %44 = arith.addf %29, %41 : vector<24x128xf32>
      %c1_i32_29 = arith.constant 1 : i32
      %45 = tpu.dynamic_rotate %30 by %c1_i32_29 dim 1 : vector<24x128xf32>, i32 -> vector<24x128xf32>
      %46 = arith.subf %28, %45 : vector<24x128xf32>
      %47 = arith.mulf %46, %46 : vector<24x128xf32>
      %cst_30 = arith.constant -1.800000e+01 : f32
      %48 = vector.broadcast %cst_30 : f32 to vector<24x128xf32>
      %49 = arith.mulf %47, %48 : vector<24x128xf32>
      %50 = math.exp %49 : vector<24x128xf32>
      %cst_31 = arith.constant 0.208885685 : f32
      %51 = vector.broadcast %cst_31 : f32 to vector<24x128xf32>
      %52 = arith.cmpf olt, %50, %51 : vector<24x128xf32>
      %cst_32 = arith.constant 1.000000e-01 : f32
      %53 = vector.broadcast %cst_32 : f32 to vector<24x128xf32>
      %54 = arith.mulf %50, %53 : vector<24x128xf32>
      %55 = arith.select %52, %54, %50 : vector<24x128xi1>, vector<24x128xf32>
      %56 = arith.mulf %55, %45 : vector<24x128xf32>
      %57 = arith.addf %43, %56 : vector<24x128xf32>
      %58 = arith.addf %44, %55 : vector<24x128xf32>
      %59 = arith.subf %28, %30 : vector<24x128xf32>
      %60 = arith.mulf %59, %59 : vector<24x128xf32>
      %cst_33 = arith.constant -1.800000e+01 : f32
      %61 = vector.broadcast %cst_33 : f32 to vector<24x128xf32>
      %62 = arith.mulf %60, %61 : vector<24x128xf32>
      %63 = math.exp %62 : vector<24x128xf32>
      %cst_34 = arith.constant 0.208885685 : f32
      %64 = vector.broadcast %cst_34 : f32 to vector<24x128xf32>
      %65 = arith.cmpf olt, %63, %64 : vector<24x128xf32>
      %cst_35 = arith.constant 1.000000e-01 : f32
      %66 = vector.broadcast %cst_35 : f32 to vector<24x128xf32>
      %67 = arith.mulf %63, %66 : vector<24x128xf32>
      %68 = arith.select %65, %67, %63 : vector<24x128xi1>, vector<24x128xf32>
      %69 = arith.mulf %68, %30 : vector<24x128xf32>
      %70 = arith.addf %57, %69 : vector<24x128xf32>
      %71 = arith.addf %58, %68 : vector<24x128xf32>
      %c127_i32 = arith.constant 127 : i32
      %72 = tpu.dynamic_rotate %30 by %c127_i32 dim 1 : vector<24x128xf32>, i32 -> vector<24x128xf32>
      %73 = arith.subf %28, %72 : vector<24x128xf32>
      %74 = arith.mulf %73, %73 : vector<24x128xf32>
      %cst_36 = arith.constant -1.800000e+01 : f32
      %75 = vector.broadcast %cst_36 : f32 to vector<24x128xf32>
      %76 = arith.mulf %74, %75 : vector<24x128xf32>
      %77 = math.exp %76 : vector<24x128xf32>
      %cst_37 = arith.constant 0.208885685 : f32
      %78 = vector.broadcast %cst_37 : f32 to vector<24x128xf32>
      %79 = arith.cmpf olt, %77, %78 : vector<24x128xf32>
      %cst_38 = arith.constant 1.000000e-01 : f32
      %80 = vector.broadcast %cst_38 : f32 to vector<24x128xf32>
      %81 = arith.mulf %77, %80 : vector<24x128xf32>
      %82 = arith.select %79, %81, %77 : vector<24x128xi1>, vector<24x128xf32>
      %83 = arith.mulf %82, %72 : vector<24x128xf32>
      %84 = arith.addf %70, %83 : vector<24x128xf32>
      %85 = arith.addf %71, %82 : vector<24x128xf32>
      %c126_i32 = arith.constant 126 : i32
      %86 = tpu.dynamic_rotate %30 by %c126_i32 dim 1 : vector<24x128xf32>, i32 -> vector<24x128xf32>
      %87 = arith.subf %28, %86 : vector<24x128xf32>
      %88 = arith.mulf %87, %87 : vector<24x128xf32>
      %cst_39 = arith.constant -1.800000e+01 : f32
      %89 = vector.broadcast %cst_39 : f32 to vector<24x128xf32>
      %90 = arith.mulf %88, %89 : vector<24x128xf32>
      %91 = math.exp %90 : vector<24x128xf32>
      %cst_40 = arith.constant 0.208885685 : f32
      %92 = vector.broadcast %cst_40 : f32 to vector<24x128xf32>
      %93 = arith.cmpf olt, %91, %92 : vector<24x128xf32>
      %cst_41 = arith.constant 1.000000e-01 : f32
      %94 = vector.broadcast %cst_41 : f32 to vector<24x128xf32>
      %95 = arith.mulf %91, %94 : vector<24x128xf32>
      %96 = arith.select %93, %95, %91 : vector<24x128xi1>, vector<24x128xf32>
      %97 = arith.mulf %96, %86 : vector<24x128xf32>
      %98 = arith.addf %84, %97 : vector<24x128xf32>
      %99 = arith.addf %85, %96 : vector<24x128xf32>
      %c1_i32_42 = arith.constant 1 : i32
      %100 = tpu.dynamic_rotate %28 by %c1_i32_42 dim 0 : vector<24x128xf32>, i32 -> vector<24x128xf32>
      %c2_i32_43 = arith.constant 2 : i32
      %101 = tpu.dynamic_rotate %100 by %c2_i32_43 dim 1 : vector<24x128xf32>, i32 -> vector<24x128xf32>
      %102 = arith.subf %28, %101 : vector<24x128xf32>
      %103 = arith.mulf %102, %102 : vector<24x128xf32>
      %cst_44 = arith.constant -1.800000e+01 : f32
      %104 = vector.broadcast %cst_44 : f32 to vector<24x128xf32>
      %105 = arith.mulf %103, %104 : vector<24x128xf32>
      %106 = math.exp %105 : vector<24x128xf32>
      %cst_45 = arith.constant 0.208885685 : f32
      %107 = vector.broadcast %cst_45 : f32 to vector<24x128xf32>
      %108 = arith.cmpf olt, %106, %107 : vector<24x128xf32>
      %cst_46 = arith.constant 1.000000e-01 : f32
      %109 = vector.broadcast %cst_46 : f32 to vector<24x128xf32>
      %110 = arith.mulf %106, %109 : vector<24x128xf32>
      %111 = arith.select %108, %110, %106 : vector<24x128xi1>, vector<24x128xf32>
      %112 = arith.mulf %111, %101 : vector<24x128xf32>
      %113 = arith.addf %98, %112 : vector<24x128xf32>
      %114 = arith.addf %99, %111 : vector<24x128xf32>
      %c1_i32_47 = arith.constant 1 : i32
      %115 = tpu.dynamic_rotate %100 by %c1_i32_47 dim 1 : vector<24x128xf32>, i32 -> vector<24x128xf32>
      %116 = arith.subf %28, %115 : vector<24x128xf32>
      %117 = arith.mulf %116, %116 : vector<24x128xf32>
      %cst_48 = arith.constant -1.800000e+01 : f32
      %118 = vector.broadcast %cst_48 : f32 to vector<24x128xf32>
      %119 = arith.mulf %117, %118 : vector<24x128xf32>
      %120 = math.exp %119 : vector<24x128xf32>
      %cst_49 = arith.constant 0.208885685 : f32
      %121 = vector.broadcast %cst_49 : f32 to vector<24x128xf32>
      %122 = arith.cmpf olt, %120, %121 : vector<24x128xf32>
      %cst_50 = arith.constant 1.000000e-01 : f32
      %123 = vector.broadcast %cst_50 : f32 to vector<24x128xf32>
      %124 = arith.mulf %120, %123 : vector<24x128xf32>
      %125 = arith.select %122, %124, %120 : vector<24x128xi1>, vector<24x128xf32>
      %126 = arith.mulf %125, %115 : vector<24x128xf32>
      %127 = arith.addf %113, %126 : vector<24x128xf32>
      %128 = arith.addf %114, %125 : vector<24x128xf32>
      %129 = arith.subf %28, %100 : vector<24x128xf32>
      %130 = arith.mulf %129, %129 : vector<24x128xf32>
      %cst_51 = arith.constant -1.800000e+01 : f32
      %131 = vector.broadcast %cst_51 : f32 to vector<24x128xf32>
      %132 = arith.mulf %130, %131 : vector<24x128xf32>
      %133 = math.exp %132 : vector<24x128xf32>
      %cst_52 = arith.constant 0.208885685 : f32
      %134 = vector.broadcast %cst_52 : f32 to vector<24x128xf32>
      %135 = arith.cmpf olt, %133, %134 : vector<24x128xf32>
      %cst_53 = arith.constant 1.000000e-01 : f32
      %136 = vector.broadcast %cst_53 : f32 to vector<24x128xf32>
      %137 = arith.mulf %133, %136 : vector<24x128xf32>
      %138 = arith.select %135, %137, %133 : vector<24x128xi1>, vector<24x128xf32>
      %139 = arith.mulf %138, %100 : vector<24x128xf32>
      %140 = arith.addf %127, %139 : vector<24x128xf32>
      %141 = arith.addf %128, %138 : vector<24x128xf32>
      %c127_i32_54 = arith.constant 127 : i32
      %142 = tpu.dynamic_rotate %100 by %c127_i32_54 dim 1 : vector<24x128xf32>, i32 -> vector<24x128xf32>
      %143 = arith.subf %28, %142 : vector<24x128xf32>
      %144 = arith.mulf %143, %143 : vector<24x128xf32>
      %cst_55 = arith.constant -1.800000e+01 : f32
      %145 = vector.broadcast %cst_55 : f32 to vector<24x128xf32>
      %146 = arith.mulf %144, %145 : vector<24x128xf32>
      %147 = math.exp %146 : vector<24x128xf32>
      %cst_56 = arith.constant 0.208885685 : f32
      %148 = vector.broadcast %cst_56 : f32 to vector<24x128xf32>
      %149 = arith.cmpf olt, %147, %148 : vector<24x128xf32>
      %cst_57 = arith.constant 1.000000e-01 : f32
      %150 = vector.broadcast %cst_57 : f32 to vector<24x128xf32>
      %151 = arith.mulf %147, %150 : vector<24x128xf32>
      %152 = arith.select %149, %151, %147 : vector<24x128xi1>, vector<24x128xf32>
      %153 = arith.mulf %152, %142 : vector<24x128xf32>
      %154 = arith.addf %140, %153 : vector<24x128xf32>
      %155 = arith.addf %141, %152 : vector<24x128xf32>
      %c126_i32_58 = arith.constant 126 : i32
      %156 = tpu.dynamic_rotate %100 by %c126_i32_58 dim 1 : vector<24x128xf32>, i32 -> vector<24x128xf32>
      %157 = arith.subf %28, %156 : vector<24x128xf32>
      %158 = arith.mulf %157, %157 : vector<24x128xf32>
      %cst_59 = arith.constant -1.800000e+01 : f32
      %159 = vector.broadcast %cst_59 : f32 to vector<24x128xf32>
      %160 = arith.mulf %158, %159 : vector<24x128xf32>
      %161 = math.exp %160 : vector<24x128xf32>
      %cst_60 = arith.constant 0.208885685 : f32
      %162 = vector.broadcast %cst_60 : f32 to vector<24x128xf32>
      %163 = arith.cmpf olt, %161, %162 : vector<24x128xf32>
      %cst_61 = arith.constant 1.000000e-01 : f32
      %164 = vector.broadcast %cst_61 : f32 to vector<24x128xf32>
      %165 = arith.mulf %161, %164 : vector<24x128xf32>
      %166 = arith.select %163, %165, %161 : vector<24x128xi1>, vector<24x128xf32>
      %167 = arith.mulf %166, %156 : vector<24x128xf32>
      %168 = arith.addf %154, %167 : vector<24x128xf32>
      %169 = arith.addf %155, %166 : vector<24x128xf32>
      %c2_i32_62 = arith.constant 2 : i32
      %170 = tpu.dynamic_rotate %28 by %c2_i32_62 dim 1 : vector<24x128xf32>, i32 -> vector<24x128xf32>
      %171 = arith.subf %28, %170 : vector<24x128xf32>
      %172 = arith.mulf %171, %171 : vector<24x128xf32>
      %cst_63 = arith.constant -1.800000e+01 : f32
      %173 = vector.broadcast %cst_63 : f32 to vector<24x128xf32>
      %174 = arith.mulf %172, %173 : vector<24x128xf32>
      %175 = math.exp %174 : vector<24x128xf32>
      %cst_64 = arith.constant 0.208885685 : f32
      %176 = vector.broadcast %cst_64 : f32 to vector<24x128xf32>
      %177 = arith.cmpf olt, %175, %176 : vector<24x128xf32>
      %cst_65 = arith.constant 1.000000e-01 : f32
      %178 = vector.broadcast %cst_65 : f32 to vector<24x128xf32>
      %179 = arith.mulf %175, %178 : vector<24x128xf32>
      %180 = arith.select %177, %179, %175 : vector<24x128xi1>, vector<24x128xf32>
      %181 = arith.mulf %180, %170 : vector<24x128xf32>
      %182 = arith.addf %168, %181 : vector<24x128xf32>
      %183 = arith.addf %169, %180 : vector<24x128xf32>
      %c1_i32_66 = arith.constant 1 : i32
      %184 = tpu.dynamic_rotate %28 by %c1_i32_66 dim 1 : vector<24x128xf32>, i32 -> vector<24x128xf32>
      %185 = arith.subf %28, %184 : vector<24x128xf32>
      %186 = arith.mulf %185, %185 : vector<24x128xf32>
      %cst_67 = arith.constant -1.800000e+01 : f32
      %187 = vector.broadcast %cst_67 : f32 to vector<24x128xf32>
      %188 = arith.mulf %186, %187 : vector<24x128xf32>
      %189 = math.exp %188 : vector<24x128xf32>
      %cst_68 = arith.constant 0.208885685 : f32
      %190 = vector.broadcast %cst_68 : f32 to vector<24x128xf32>
      %191 = arith.cmpf olt, %189, %190 : vector<24x128xf32>
      %cst_69 = arith.constant 1.000000e-01 : f32
      %192 = vector.broadcast %cst_69 : f32 to vector<24x128xf32>
      %193 = arith.mulf %189, %192 : vector<24x128xf32>
      %194 = arith.select %191, %193, %189 : vector<24x128xi1>, vector<24x128xf32>
      %195 = arith.mulf %194, %184 : vector<24x128xf32>
      %196 = arith.addf %182, %195 : vector<24x128xf32>
      %197 = arith.addf %183, %194 : vector<24x128xf32>
      %c127_i32_70 = arith.constant 127 : i32
      %198 = tpu.dynamic_rotate %28 by %c127_i32_70 dim 1 : vector<24x128xf32>, i32 -> vector<24x128xf32>
      %199 = arith.subf %28, %198 : vector<24x128xf32>
      %200 = arith.mulf %199, %199 : vector<24x128xf32>
      %cst_71 = arith.constant -1.800000e+01 : f32
      %201 = vector.broadcast %cst_71 : f32 to vector<24x128xf32>
      %202 = arith.mulf %200, %201 : vector<24x128xf32>
      %203 = math.exp %202 : vector<24x128xf32>
      %cst_72 = arith.constant 0.208885685 : f32
      %204 = vector.broadcast %cst_72 : f32 to vector<24x128xf32>
      %205 = arith.cmpf olt, %203, %204 : vector<24x128xf32>
      %cst_73 = arith.constant 1.000000e-01 : f32
      %206 = vector.broadcast %cst_73 : f32 to vector<24x128xf32>
      %207 = arith.mulf %203, %206 : vector<24x128xf32>
      %208 = arith.select %205, %207, %203 : vector<24x128xi1>, vector<24x128xf32>
      %209 = arith.mulf %208, %198 : vector<24x128xf32>
      %210 = arith.addf %196, %209 : vector<24x128xf32>
      %211 = arith.addf %197, %208 : vector<24x128xf32>
      %c126_i32_74 = arith.constant 126 : i32
      %212 = tpu.dynamic_rotate %28 by %c126_i32_74 dim 1 : vector<24x128xf32>, i32 -> vector<24x128xf32>
      %213 = arith.subf %28, %212 : vector<24x128xf32>
      %214 = arith.mulf %213, %213 : vector<24x128xf32>
      %cst_75 = arith.constant -1.800000e+01 : f32
      %215 = vector.broadcast %cst_75 : f32 to vector<24x128xf32>
      %216 = arith.mulf %214, %215 : vector<24x128xf32>
      %217 = math.exp %216 : vector<24x128xf32>
      %cst_76 = arith.constant 0.208885685 : f32
      %218 = vector.broadcast %cst_76 : f32 to vector<24x128xf32>
      %219 = arith.cmpf olt, %217, %218 : vector<24x128xf32>
      %cst_77 = arith.constant 1.000000e-01 : f32
      %220 = vector.broadcast %cst_77 : f32 to vector<24x128xf32>
      %221 = arith.mulf %217, %220 : vector<24x128xf32>
      %222 = arith.select %219, %221, %217 : vector<24x128xi1>, vector<24x128xf32>
      %223 = arith.mulf %222, %212 : vector<24x128xf32>
      %224 = arith.addf %210, %223 : vector<24x128xf32>
      %225 = arith.addf %211, %222 : vector<24x128xf32>
      %c23_i32 = arith.constant 23 : i32
      %226 = tpu.dynamic_rotate %28 by %c23_i32 dim 0 : vector<24x128xf32>, i32 -> vector<24x128xf32>
      %c2_i32_78 = arith.constant 2 : i32
      %227 = tpu.dynamic_rotate %226 by %c2_i32_78 dim 1 : vector<24x128xf32>, i32 -> vector<24x128xf32>
      %228 = arith.subf %28, %227 : vector<24x128xf32>
      %229 = arith.mulf %228, %228 : vector<24x128xf32>
      %cst_79 = arith.constant -1.800000e+01 : f32
      %230 = vector.broadcast %cst_79 : f32 to vector<24x128xf32>
      %231 = arith.mulf %229, %230 : vector<24x128xf32>
      %232 = math.exp %231 : vector<24x128xf32>
      %cst_80 = arith.constant 0.208885685 : f32
      %233 = vector.broadcast %cst_80 : f32 to vector<24x128xf32>
      %234 = arith.cmpf olt, %232, %233 : vector<24x128xf32>
      %cst_81 = arith.constant 1.000000e-01 : f32
      %235 = vector.broadcast %cst_81 : f32 to vector<24x128xf32>
      %236 = arith.mulf %232, %235 : vector<24x128xf32>
      %237 = arith.select %234, %236, %232 : vector<24x128xi1>, vector<24x128xf32>
      %238 = arith.mulf %237, %227 : vector<24x128xf32>
      %239 = arith.addf %224, %238 : vector<24x128xf32>
      %240 = arith.addf %225, %237 : vector<24x128xf32>
      %c1_i32_82 = arith.constant 1 : i32
      %241 = tpu.dynamic_rotate %226 by %c1_i32_82 dim 1 : vector<24x128xf32>, i32 -> vector<24x128xf32>
      %242 = arith.subf %28, %241 : vector<24x128xf32>
      %243 = arith.mulf %242, %242 : vector<24x128xf32>
      %cst_83 = arith.constant -1.800000e+01 : f32
      %244 = vector.broadcast %cst_83 : f32 to vector<24x128xf32>
      %245 = arith.mulf %243, %244 : vector<24x128xf32>
      %246 = math.exp %245 : vector<24x128xf32>
      %cst_84 = arith.constant 0.208885685 : f32
      %247 = vector.broadcast %cst_84 : f32 to vector<24x128xf32>
      %248 = arith.cmpf olt, %246, %247 : vector<24x128xf32>
      %cst_85 = arith.constant 1.000000e-01 : f32
      %249 = vector.broadcast %cst_85 : f32 to vector<24x128xf32>
      %250 = arith.mulf %246, %249 : vector<24x128xf32>
      %251 = arith.select %248, %250, %246 : vector<24x128xi1>, vector<24x128xf32>
      %252 = arith.mulf %251, %241 : vector<24x128xf32>
      %253 = arith.addf %239, %252 : vector<24x128xf32>
      %254 = arith.addf %240, %251 : vector<24x128xf32>
      %255 = arith.subf %28, %226 : vector<24x128xf32>
      %256 = arith.mulf %255, %255 : vector<24x128xf32>
      %cst_86 = arith.constant -1.800000e+01 : f32
      %257 = vector.broadcast %cst_86 : f32 to vector<24x128xf32>
      %258 = arith.mulf %256, %257 : vector<24x128xf32>
      %259 = math.exp %258 : vector<24x128xf32>
      %cst_87 = arith.constant 0.208885685 : f32
      %260 = vector.broadcast %cst_87 : f32 to vector<24x128xf32>
      %261 = arith.cmpf olt, %259, %260 : vector<24x128xf32>
      %cst_88 = arith.constant 1.000000e-01 : f32
      %262 = vector.broadcast %cst_88 : f32 to vector<24x128xf32>
      %263 = arith.mulf %259, %262 : vector<24x128xf32>
      %264 = arith.select %261, %263, %259 : vector<24x128xi1>, vector<24x128xf32>
      %265 = arith.mulf %264, %226 : vector<24x128xf32>
      %266 = arith.addf %253, %265 : vector<24x128xf32>
      %267 = arith.addf %254, %264 : vector<24x128xf32>
      %c127_i32_89 = arith.constant 127 : i32
      %268 = tpu.dynamic_rotate %226 by %c127_i32_89 dim 1 : vector<24x128xf32>, i32 -> vector<24x128xf32>
      %269 = arith.subf %28, %268 : vector<24x128xf32>
      %270 = arith.mulf %269, %269 : vector<24x128xf32>
      %cst_90 = arith.constant -1.800000e+01 : f32
      %271 = vector.broadcast %cst_90 : f32 to vector<24x128xf32>
      %272 = arith.mulf %270, %271 : vector<24x128xf32>
      %273 = math.exp %272 : vector<24x128xf32>
      %cst_91 = arith.constant 0.208885685 : f32
      %274 = vector.broadcast %cst_91 : f32 to vector<24x128xf32>
      %275 = arith.cmpf olt, %273, %274 : vector<24x128xf32>
      %cst_92 = arith.constant 1.000000e-01 : f32
      %276 = vector.broadcast %cst_92 : f32 to vector<24x128xf32>
      %277 = arith.mulf %273, %276 : vector<24x128xf32>
      %278 = arith.select %275, %277, %273 : vector<24x128xi1>, vector<24x128xf32>
      %279 = arith.mulf %278, %268 : vector<24x128xf32>
      %280 = arith.addf %266, %279 : vector<24x128xf32>
      %281 = arith.addf %267, %278 : vector<24x128xf32>
      %c126_i32_93 = arith.constant 126 : i32
      %282 = tpu.dynamic_rotate %226 by %c126_i32_93 dim 1 : vector<24x128xf32>, i32 -> vector<24x128xf32>
      %283 = arith.subf %28, %282 : vector<24x128xf32>
      %284 = arith.mulf %283, %283 : vector<24x128xf32>
      %cst_94 = arith.constant -1.800000e+01 : f32
      %285 = vector.broadcast %cst_94 : f32 to vector<24x128xf32>
      %286 = arith.mulf %284, %285 : vector<24x128xf32>
      %287 = math.exp %286 : vector<24x128xf32>
      %cst_95 = arith.constant 0.208885685 : f32
      %288 = vector.broadcast %cst_95 : f32 to vector<24x128xf32>
      %289 = arith.cmpf olt, %287, %288 : vector<24x128xf32>
      %cst_96 = arith.constant 1.000000e-01 : f32
      %290 = vector.broadcast %cst_96 : f32 to vector<24x128xf32>
      %291 = arith.mulf %287, %290 : vector<24x128xf32>
      %292 = arith.select %289, %291, %287 : vector<24x128xi1>, vector<24x128xf32>
      %293 = arith.mulf %292, %282 : vector<24x128xf32>
      %294 = arith.addf %280, %293 : vector<24x128xf32>
      %295 = arith.addf %281, %292 : vector<24x128xf32>
      %c22_i32 = arith.constant 22 : i32
      %296 = tpu.dynamic_rotate %28 by %c22_i32 dim 0 : vector<24x128xf32>, i32 -> vector<24x128xf32>
      %c2_i32_97 = arith.constant 2 : i32
      %297 = tpu.dynamic_rotate %296 by %c2_i32_97 dim 1 : vector<24x128xf32>, i32 -> vector<24x128xf32>
      %298 = arith.subf %28, %297 : vector<24x128xf32>
      %299 = arith.mulf %298, %298 : vector<24x128xf32>
      %cst_98 = arith.constant -1.800000e+01 : f32
      %300 = vector.broadcast %cst_98 : f32 to vector<24x128xf32>
      %301 = arith.mulf %299, %300 : vector<24x128xf32>
      %302 = math.exp %301 : vector<24x128xf32>
      %cst_99 = arith.constant 0.208885685 : f32
      %303 = vector.broadcast %cst_99 : f32 to vector<24x128xf32>
      %304 = arith.cmpf olt, %302, %303 : vector<24x128xf32>
      %cst_100 = arith.constant 1.000000e-01 : f32
      %305 = vector.broadcast %cst_100 : f32 to vector<24x128xf32>
      %306 = arith.mulf %302, %305 : vector<24x128xf32>
      %307 = arith.select %304, %306, %302 : vector<24x128xi1>, vector<24x128xf32>
      %308 = arith.mulf %307, %297 : vector<24x128xf32>
      %309 = arith.addf %294, %308 : vector<24x128xf32>
      %310 = arith.addf %295, %307 : vector<24x128xf32>
      %c1_i32_101 = arith.constant 1 : i32
      %311 = tpu.dynamic_rotate %296 by %c1_i32_101 dim 1 : vector<24x128xf32>, i32 -> vector<24x128xf32>
      %312 = arith.subf %28, %311 : vector<24x128xf32>
      %313 = arith.mulf %312, %312 : vector<24x128xf32>
      %cst_102 = arith.constant -1.800000e+01 : f32
      %314 = vector.broadcast %cst_102 : f32 to vector<24x128xf32>
      %315 = arith.mulf %313, %314 : vector<24x128xf32>
      %316 = math.exp %315 : vector<24x128xf32>
      %cst_103 = arith.constant 0.208885685 : f32
      %317 = vector.broadcast %cst_103 : f32 to vector<24x128xf32>
      %318 = arith.cmpf olt, %316, %317 : vector<24x128xf32>
      %cst_104 = arith.constant 1.000000e-01 : f32
      %319 = vector.broadcast %cst_104 : f32 to vector<24x128xf32>
      %320 = arith.mulf %316, %319 : vector<24x128xf32>
      %321 = arith.select %318, %320, %316 : vector<24x128xi1>, vector<24x128xf32>
      %322 = arith.mulf %321, %311 : vector<24x128xf32>
      %323 = arith.addf %309, %322 : vector<24x128xf32>
      %324 = arith.addf %310, %321 : vector<24x128xf32>
      %325 = arith.subf %28, %296 : vector<24x128xf32>
      %326 = arith.mulf %325, %325 : vector<24x128xf32>
      %cst_105 = arith.constant -1.800000e+01 : f32
      %327 = vector.broadcast %cst_105 : f32 to vector<24x128xf32>
      %328 = arith.mulf %326, %327 : vector<24x128xf32>
      %329 = math.exp %328 : vector<24x128xf32>
      %cst_106 = arith.constant 0.208885685 : f32
      %330 = vector.broadcast %cst_106 : f32 to vector<24x128xf32>
      %331 = arith.cmpf olt, %329, %330 : vector<24x128xf32>
      %cst_107 = arith.constant 1.000000e-01 : f32
      %332 = vector.broadcast %cst_107 : f32 to vector<24x128xf32>
      %333 = arith.mulf %329, %332 : vector<24x128xf32>
      %334 = arith.select %331, %333, %329 : vector<24x128xi1>, vector<24x128xf32>
      %335 = arith.mulf %334, %296 : vector<24x128xf32>
      %336 = arith.addf %323, %335 : vector<24x128xf32>
      %337 = arith.addf %324, %334 : vector<24x128xf32>
      %c127_i32_108 = arith.constant 127 : i32
      %338 = tpu.dynamic_rotate %296 by %c127_i32_108 dim 1 : vector<24x128xf32>, i32 -> vector<24x128xf32>
      %339 = arith.subf %28, %338 : vector<24x128xf32>
      %340 = arith.mulf %339, %339 : vector<24x128xf32>
      %cst_109 = arith.constant -1.800000e+01 : f32
      %341 = vector.broadcast %cst_109 : f32 to vector<24x128xf32>
      %342 = arith.mulf %340, %341 : vector<24x128xf32>
      %343 = math.exp %342 : vector<24x128xf32>
      %cst_110 = arith.constant 0.208885685 : f32
      %344 = vector.broadcast %cst_110 : f32 to vector<24x128xf32>
      %345 = arith.cmpf olt, %343, %344 : vector<24x128xf32>
      %cst_111 = arith.constant 1.000000e-01 : f32
      %346 = vector.broadcast %cst_111 : f32 to vector<24x128xf32>
      %347 = arith.mulf %343, %346 : vector<24x128xf32>
      %348 = arith.select %345, %347, %343 : vector<24x128xi1>, vector<24x128xf32>
      %349 = arith.mulf %348, %338 : vector<24x128xf32>
      %350 = arith.addf %336, %349 : vector<24x128xf32>
      %351 = arith.addf %337, %348 : vector<24x128xf32>
      %c126_i32_112 = arith.constant 126 : i32
      %352 = tpu.dynamic_rotate %296 by %c126_i32_112 dim 1 : vector<24x128xf32>, i32 -> vector<24x128xf32>
      %353 = arith.subf %28, %352 : vector<24x128xf32>
      %354 = arith.mulf %353, %353 : vector<24x128xf32>
      %cst_113 = arith.constant -1.800000e+01 : f32
      %355 = vector.broadcast %cst_113 : f32 to vector<24x128xf32>
      %356 = arith.mulf %354, %355 : vector<24x128xf32>
      %357 = math.exp %356 : vector<24x128xf32>
      %cst_114 = arith.constant 0.208885685 : f32
      %358 = vector.broadcast %cst_114 : f32 to vector<24x128xf32>
      %359 = arith.cmpf olt, %357, %358 : vector<24x128xf32>
      %cst_115 = arith.constant 1.000000e-01 : f32
      %360 = vector.broadcast %cst_115 : f32 to vector<24x128xf32>
      %361 = arith.mulf %357, %360 : vector<24x128xf32>
      %362 = arith.select %359, %361, %357 : vector<24x128xi1>, vector<24x128xf32>
      %363 = arith.mulf %362, %352 : vector<24x128xf32>
      %364 = arith.addf %350, %363 : vector<24x128xf32>
      %365 = arith.addf %351, %362 : vector<24x128xf32>
      %366 = arith.divf %364, %365 : vector<24x128xf32>
      %c0_116 = arith.constant 0 : index
      %c0_117 = arith.constant 0 : index
      %367 = vector.load %arg4[%c0_116, %c0_117] : memref<24x128xf32, #tpu.memory_space<vmem>>, vector<24x128xf32>
      tpu.vector_store %arg4[%c0_116, %c0_117], %366 {strides = array<i32>} : memref<24x128xf32, #tpu.memory_space<vmem>>, vector<24x128xf32>,
    }
    %c0_3 = arith.constant 0 : index
    %c0_4 = arith.constant 0 : index
    %5 = vector.load %arg4[%c0_3, %c0_4] : memref<24x128xf32, #tpu.memory_space<vmem>>, vector<24x128xf32>
    %c0_5 = arith.constant 0 : index
    %c0_6 = arith.constant 0 : index
    %6 = vector.load %arg2[%c0_5, %c0_6] : memref<24x128xf32, #tpu.memory_space<vmem>>, vector<24x128xf32>
    tpu.vector_store %arg2[%c0_5, %c0_6], %5 {strides = array<i32>} : memref<24x128xf32, #tpu.memory_space<vmem>>, vector<24x128xf32>,
    %cst_7 = arith.constant 5.100000e-01 : f32
    %7 = vector.broadcast %cst_7 : f32 to vector<24x128xf32>
    %8 = arith.divf %5, %7 : vector<24x128xf32>
    %9 = math.roundeven %8 : vector<24x128xf32>
    %10 = arith.fptosi %9 : vector<24x128xf32> to vector<24x128xi32>
    %c0_8 = arith.constant 0 : index
    %c0_9 = arith.constant 0 : index
    %11 = vector.load %arg3[%c0_8, %c0_9] : memref<24x128xi32, #tpu.memory_space<vmem>>, vector<24x128xi32>
    tpu.vector_store %arg3[%c0_8, %c0_9], %10 {strides = array<i32>} : memref<24x128xi32, #tpu.memory_space<vmem>>, vector<24x128xi32>,
    return
  }
  func.func @transform_0(%arg0: i32) -> (i32, i32) {
    %c0_i32 = arith.constant 0 : i32
    %c0_i32_0 = arith.constant 0 : i32
    return %arg0, %c0_i32 : i32, i32
  }
  func.func @transform_1(%arg0: i32) -> (i32, i32) {
    %c0_i32 = arith.constant 0 : i32
    %c0_i32_0 = arith.constant 0 : i32
    return %arg0, %c0_i32 : i32, i32
  }
  func.func @transform_2(%arg0: i32) -> (i32, i32) {
    %c0_i32 = arith.constant 0 : i32
    %c0_i32_0 = arith.constant 0 : i32
    return %arg0, %c0_i32 : i32, i32
  }
}

</mosaic_0001>

<llo_original>
// kernel: tpu_custom_call.1
$region0: #{tpu_custom_call.1}
  #allocation0 [shape = 'u32[]', space=smem, size = 0x4, offset = 0x4, fixed_abs, tag = 'smem constant byte address 0x4 - core index']
  #allocation1 [shape = 'u32[72,128]{1,0:T(1,128)}', space=vmem, size = 0x9000, scoped, tag = 'internal scratch']
  #allocation2 [shape = 'f32[24,128]{1,0:T(8,128)}', space=vmem, size = 0x3000, scoped, tag = 'scratch operand']
  %s0 = inlined_call_operand.hbm [shape: f32[48,128], index: 0, kind: input, shape index: {}]
  %s1 = inlined_call_operand.hbm [shape: f32[48,128], index: 1, kind: output, shape index: {0}]
  %s2 = inlined_call_operand.hbm [shape: s32[48,128], index: 2, kind: output, shape index: {1}]
  %3 = xla_tuple %s1, %s2
  %s4 = sld [smem:[#allocation0]]
  $region56: #{tpu_custom_call.1} parent=0
    _
  %s6 = ssub.s32 1, %s4
  %s7 = scalar_select 0, %s6, %s4
  $region1: #{tpu_custom_call.1} parent=0
    #allocation3 [shape = 'u8[24576]{0}', space=vmem, size = 0x6000, scoped, tag = 'input window, operand 0']
    #allocation4 [shape = 's32[2]{0}', space=sflag, size = 0x8, scoped, tag = 'scoped memory for tpu_custom_call.1']
    #allocation5 [shape = 's32[2]{0}', space=sflag, size = 0x8, scoped, tag = 'scoped memory for tpu_custom_call.1']
    #allocation6 [shape = 'u8[24576]{0}', space=vmem, size = 0x6000, scoped, tag = 'output window, operand 0']
    #allocation7 [shape = 'u8[24576]{0}', space=vmem, size = 0x6000, scoped, tag = 'output window, operand 1']
    #allocation8 [shape = 's32[2]{0}', space=sflag, size = 0x8, scoped, tag = 'scoped memory for tpu_custom_call.1']
    %8 = vsyncpa [#allocation4], 0
    %s9 = scalar_lea.sflag [#allocation4], 1
    %10 = vsyncpa %s9, 0
    %11 = vsyncpa [#allocation5], 0
    %s12 = scalar_lea.sflag [#allocation5], 1
    %13 = vsyncpa %s12, 0
    %14 = vsyncpa [#allocation8], 0
    %s15 = scalar_lea.sflag [#allocation8], 1
    %16 = vsyncpa %s15, 0
    loop: start=0, step=1, limit=4
    $region2: #{tpu_custom_call.1} parent=1 // loop_pre_header
      _
    $region3: #{tpu_custom_call.1} parent=1 // loop_header
      %s18 = sphi 0, %s22
      %p19 = scmp.ge.s32.totalorder %s18, 4
      %s28 = sphi 0, %s30
      %s31 = sphi 0, %s28
      %s32 = sphi 0, %s31
      %s48 = sphi 0, %s32
      %s54 = sphi 0, %s56
      %s57 = sphi 0, %s54
      %s58 = sphi 0, %s57
      %s74 = sphi 0, %s58
      %s80 = sphi 0, %s82
      %s83 = sphi 0, %s80
      %s84 = sphi 0, %s83
      %s100 = sphi 0, %s84
    $region4: #{tpu_custom_call.1} parent=1 // loop_header_branch
      %21 = sbr.rel (%p19) target = $region8
    $region5: #{tpu_custom_call.1} parent=1 // loop_body
      %s23 = ssub.s32 %s18, 1
      %s24 = ssub.s32 %s18, 2
      %s25 = sadd.s32 %s18, 1
      %s26 = ssub.s32 %s18, %s25
      %p27 = scmp.eq.s32.totalorder %s26, 0
      %s29 = sadd.s32 %s28, 1
      %s30 = scalar_select %p27, %s28, %s29
      %p33 = pneg %p27
      %p34 = scmp.eq.s32.totalorder %s18, 1
      %p35 = por %p33, %p34
      %p36 = scmp.ne.s32.totalorder %s28, %s31
      %p37 = scmp.eq.s32.totalorder %s18, 0
      %p38 = por %p36, %p37
      %p39 = scmp.ne.s32.totalorder %s28, %s31
      %p40 = scmp.eq.s32.totalorder %s23, 1
      %p41 = por %p39, %p40
      %p42 = scmp.ne.s32.totalorder %s31, %s32
      %p43 = scmp.eq.s32.totalorder %s23, 0
      %p44 = por %p42, %p43
      %p45 = scmp.ne.s32.totalorder %s31, %s32
      %p46 = scmp.eq.s32.totalorder %s24, 1
      %p47 = por %p45, %p46
      %p49 = scmp.ne.s32.totalorder %s32, %s48
      %p50 = scmp.eq.s32.totalorder %s24, 0
      %p51 = por %p49, %p50
      %s52 = ssub.s32 %s18, %s25
      %p53 = scmp.eq.s32.totalorder %s52, 0
      %s55 = sadd.s32 %s54, 1
      %s56 = scalar_select %p53, %s54, %s55
      %p59 = pneg %p53
      %p60 = scmp.eq.s32.totalorder %s18, 1
      %p61 = por %p59, %p60
      %p62 = scmp.ne.s32.totalorder %s54, %s57
      %p63 = scmp.eq.s32.totalorder %s18, 0
      %p64 = por %p62, %p63
      %p65 = scmp.ne.s32.totalorder %s54, %s57
      %p66 = scmp.eq.s32.totalorder %s23, 1
      %p67 = por %p65, %p66
      %p68 = scmp.ne.s32.totalorder %s57, %s58
      %p69 = scmp.eq.s32.totalorder %s23, 0
      %p70 = por %p68, %p69
      %p71 = scmp.ne.s32.totalorder %s57, %s58
      %p72 = scmp.eq.s32.totalorder %s24, 1
      %p73 = por %p71, %p72
      %p75 = scmp.ne.s32.totalorder %s58, %s74
      %p76 = scmp.eq.s32.totalorder %s24, 0
      %p77 = por %p75, %p76
      %s78 = ssub.s32 %s18, %s25
      %p79 = scmp.eq.s32.totalorder %s78, 0
      %s81 = sadd.s32 %s80, 1
      %s82 = scalar_select %p79, %s80, %s81
      %p85 = pneg %p79
      %p86 = scmp.eq.s32.totalorder %s18, 1
      %p87 = por %p85, %p86
      %p88 = scmp.ne.s32.totalorder %s80, %s83
      %p89 = scmp.eq.s32.totalorder %s18, 0
      %p90 = por %p88, %p89
      %p91 = scmp.ne.s32.totalorder %s80, %s83
      %p92 = scmp.eq.s32.totalorder %s23, 1
      %p93 = por %p91, %p92
      %p94 = scmp.ne.s32.totalorder %s83, %s84
      %p95 = scmp.eq.s32.totalorder %s23, 0
      %p96 = por %p94, %p95
      %p97 = scmp.ne.s32.totalorder %s83, %s84
      %p98 = scmp.eq.s32.totalorder %s24, 1
      %p99 = por %p97, %p98
      %p101 = scmp.ne.s32.totalorder %s84, %s100
      %p102 = scmp.eq.s32.totalorder %s24, 0
      %p103 = por %p101, %p102
      %p104 = scmp.le.s32.totalorder 1, %s18
      %p105 = scmp.lt.s32.totalorder %s18, 3
      %p106 = pnand %p104, %p105
      %p107 = pneg %p106
      // Predicated region
      $region9: #{tpu_custom_call.1} parent=5 // pred_check
        _
      $region10: #{tpu_custom_call.1} parent=5 // pred_check_branch
        %109 = sbr.rel (%p106) target = $region12
      $region11: #{tpu_custom_call.1} parent=5 // pred_region
        %s110 = ssub.s32 %s18, 1
      $region12: #{tpu_custom_call.1} parent=5 // pred_fallthru
        _
      %p111 = scmp.lt.s32.totalorder %s18, 2
      // Predicated region
      $region13: #{tpu_custom_call.1} parent=5 // pred_check
        %p112 = pneg %p111
      $region14: #{tpu_custom_call.1} parent=5 // pred_check_branch
        %114 = sbr.rel (%p112) target = $region16
      $region15: #{tpu_custom_call.1} parent=5 // pred_region
        // Predicated region
        $region17: #{tpu_custom_call.1} parent=15 // pred_check
          %p115 = pneg %p38
        $region18: #{tpu_custom_call.1} parent=15 // pred_check_branch
          %117 = sbr.rel (%p115) target = $region20
        $region19: #{tpu_custom_call.1} parent=15 // pred_region
          %s118 = sand.u32 %s28, 1
          %s119 = scalar_lea.sflag [#allocation4], %s118
          %s120 = sand.u32 %s28, 1
          %s121 = smul.addr %s120, 24
          %s122 = scalar_lea.vmem [#allocation3], %s121
          %s123 = smul.u32 3, %s18
          %125 = vsyncadd %s119, 0
          %s126 = smul.addr %s123, 8
          %s127 = scalar_lea.hbm %s0, %s126
          %s128 = sshll.u32 %s127, 4
          %s129 = int_to_ptr.hbm [resolvable:$true] %s128
          %s130 = sshll.u32 %s122, 4
          %s131 = int_to_ptr.vmem [resolvable:$true] %s130
          %136 = dma.hbm_to_vmem [thread:$0]  %s129, 384, %s131, %s119, 128, 128, 8
        $region20: #{tpu_custom_call.1} parent=15 // pred_fallthru
          _
      $region16: #{tpu_custom_call.1} parent=5 // pred_fallthru
        _
      %p137 = scmp.le.s32.totalorder 1, %s18
      %p138 = scmp.lt.s32.totalorder %s18, 3
      %p139 = pnand %p137, %p138
      %p140 = pneg %p139
      // Predicated region
      $region21: #{tpu_custom_call.1} parent=5 // pred_check
        _
      $region22: #{tpu_custom_call.1} parent=5 // pred_check_branch
        %142 = sbr.rel (%p139) target = $region24
      $region23: #{tpu_custom_call.1} parent=5 // pred_region
        %s143 = ssub.s32 %s18, 1
        %s144 = sand.u32 %s31, 1
        %s145 = scalar_lea.sflag [#allocation4], %s144
        %s146 = sand.u32 %s31, 1
        %s147 = smul.addr %s146, 24
        %s148 = scalar_lea.vmem [#allocation3], %s147
        // Predicated region
        $region25: #{tpu_custom_call.1} parent=23 // pred_check
          %p149 = pneg %p44
        $region26: #{tpu_custom_call.1} parent=23 // pred_check_branch
          %151 = sbr.rel (%p149) target = $region28
        $region27: #{tpu_custom_call.1} parent=23 // pred_region
          %153 = dma.done %s145, 384
        $region28: #{tpu_custom_call.1} parent=23 // pred_fallthru
          _
        %s154 = sand.u32 %s31, 1
        %s155 = scalar_lea.sflag [#allocation4], %s154
        %s156 = sand.u32 %s31, 1
        %s157 = smul.addr %s156, 24
        %s158 = scalar_lea.vmem [#allocation3], %s157
        %p159 = pneg %p44
        %p160 = pneg %p41
        %p161 = pneg %p70
        %p162 = pneg %p67
        %s163 = sand.u32 %s57, 1
        %s164 = scalar_lea.sflag [#allocation5], %s163
        %s165 = sand.u32 %s57, 1
        %s166 = smul.addr %s165, 24
        %s167 = scalar_lea.vmem [#allocation6], %s166
        %p168 = pneg %p96
        %p169 = pneg %p93
        %s170 = sand.u32 %s83, 1
        %s171 = scalar_lea.sflag [#allocation8], %s170
        %s172 = sand.u32 %s83, 1
        %s173 = smul.addr %s172, 24
        %s174 = scalar_lea.vmem [#allocation7], %s173
        %s175 = smul.u32 3, %s23
        %s176 = smul.u32 3, %s23
        %s177 = smul.u32 3, %s23
        %v178 = vld [vmem:[%s148] sm:$0xff]
        %v179 = vld [vmem:[%s148 + $0x8] sm:$0xff]
        %v180 = vld [vmem:[%s148 + $0x10] sm:$0xff]
        %v181 = vmax.f32 %v178, 0.0
        %v182 = vmax.f32 %v179, 0.0
        %v183 = vmax.f32 %v180, 0.0
        %184 = vst [vmem:[#allocation2] sm:$0xff] %v181
        %185 = vst [vmem:[#allocation2 + $0x8] sm:$0xff] %v182
        %186 = vst [vmem:[#allocation2 + $0x10] sm:$0xff] %v183
        loop: start=0, step=1, limit=4
        $region29: #{tpu_custom_call.1} parent=23 // loop_pre_header
          _
        $region30: #{tpu_custom_call.1} parent=23 // loop_header
          %s188 = sphi 0, %s192
          %p189 = scmp.ge.s32.totalorder %s188, 4
        $region31: #{tpu_custom_call.1} parent=23 // loop_header_branch
          %191 = sbr.rel (%p189) target = $region35
        $region32: #{tpu_custom_call.1} parent=23 // loop_body
          %v193 = vld [vmem:[#allocation2] sm:$0xff]
          %v194 = vld [vmem:[#allocation2 + $0x8] sm:$0xff]
          %v195 = vld [vmem:[#allocation2 + $0x10] sm:$0xff]
          %197 = vset.pattern.permute.xlu0 15
          %198 = vperm.xlu0 %197, %v193
          %v199 = vpop.permute.xlu0 %198
          %202 = vset.pattern.permute.xlu0 15
          %203 = vperm.xlu0 %202, %v194
          %v204 = vpop.permute.xlu0 %203
          %207 = vset.pattern.permute.xlu0 15
          %208 = vperm.xlu0 %207, %v195
          %v209 = vpop.permute.xlu0 %208
          %vm211 = vcmask 146560
          %212 = vst.msk [vmem:[#allocation2] sm:$0xff] %vm211, %v199
          %213 = vst.msk [vmem:[#allocation2 + $0x8] sm:$0xff] %vm211, %v204
          %214 = vst.msk [vmem:[#allocation2 + $0x10] sm:$0xff] %vm211, %v209
          %v215 = vld [vmem:[#allocation2] sm:$0xff]
          %v216 = vld [vmem:[#allocation2 + $0x8] sm:$0xff]
          %v217 = vld [vmem:[#allocation2 + $0x10] sm:$0xff]
          %219 = vset.pattern.permute.xlu0 0
          %220 = vperm.xlu0 %219, %v215
          %v221 = vpop.permute.xlu0 %220
          %224 = vset.pattern.permute.xlu0 0
          %225 = vperm.xlu0 %224, %v216
          %v226 = vpop.permute.xlu0 %225
          %229 = vset.pattern.permute.xlu0 0
          %230 = vperm.xlu0 %229, %v217
          %v231 = vpop.permute.xlu0 %230
          %vm233 = vcmask 1048560
          %234 = vst.msk [vmem:[#allocation2] sm:$0xff] %vm233, %v221
          %235 = vst.msk [vmem:[#allocation2 + $0x8] sm:$0xff] %vm233, %v226
          %236 = vst.msk [vmem:[#allocation2 + $0x10] sm:$0xff] %vm233, %v231
          %v237 = vld [vmem:[#allocation2 + $0xf] sm:$0x1]
          %v238 = vperm.slane %v237, 0
          %239 = vst [vmem:[#allocation2 + $0x10] sm:$0x3] %v238
          %v240 = vld [vmem:[#allocation2] sm:$0x1]
          %v241 = vperm.slane %v240, 0
          %242 = vst [vmem:[#allocation2 + $0x16] sm:$0x3] %v241
          %v243 = vld [vmem:[#allocation2] sm:$0xff]
          %v244 = vld [vmem:[#allocation2 + $0x8] sm:$0xff]
          %v245 = vld [vmem:[#allocation2 + $0x10] sm:$0xff]
          %v246 = vrot.slane %v243, 6
          %v247 = vrot.slane %v244, 6
          %v248 = vrot.slane %v245, 6
          %v249 = vlaneseq
          %v250 = vshrl.u32 %v249, 7
          %vm251 = vcmp.lt.s32.totalorder %v250, 2
          %v252 = vsel %vm251, %v247, %v248
          %v253 = vsel %vm251, %v246, %v247
          %v254 = vsel %vm251, %v248, %v246
          %255 = vrot.lane.b32.xlu0 %v254, 2
          %v256 = vpop.permute.xlu0 %255
          %257 = vrot.lane.b32.xlu0 %v253, 2
          %v258 = vpop.permute.xlu0 %257
          %259 = vrot.lane.b32.xlu0 %v252, 2
          %v260 = vpop.permute.xlu0 %259
          %v261 = vsub.f32 %v243, %v256
          %v262 = vsub.f32 %v244, %v258
          %v263 = vsub.f32 %v245, %v260
          %v264 = vmul.f32 %v261, %v261
          %v265 = vmul.f32 %v262, %v262
          %v266 = vmul.f32 %v263, %v263
          %v267 = vmul.f32 %v264, -18.0
          %v268 = vmul.f32 %v265, -18.0
          %v269 = vmul.f32 %v266, -18.0
          %v270 = vmul.f32 %v267, 1.442695
          %v271 = vpow.pop %v270
          %v272 = vmul.f32 %v268, 1.442695
          %v273 = vpow.pop %v272
          %v274 = vmul.f32 %v269, 1.442695
          %v275 = vpow.pop %v274
          %vm276 = vcmp.lt.f32.partialorder %v271, 0.20888568
          %vm277 = vcmp.lt.f32.partialorder %v273, 0.20888568
          %vm278 = vcmp.lt.f32.partialorder %v275, 0.20888568
          %v279 = vmul.f32 %v271, 0.1
          %v280 = vmul.f32 %v273, 0.1
          %v281 = vmul.f32 %v275, 0.1
          %v282 = vsel %vm276, %v279, %v271
          %v283 = vsel %vm277, %v280, %v273
          %v284 = vsel %vm278, %v281, %v275
          %v285 = vmul.f32 %v282, %v256
          %v286 = vmul.f32 %v283, %v258
          %v287 = vmul.f32 %v284, %v260
          %v288 = vadd.f32 %v243, %v285
          %v289 = vadd.f32 %v244, %v286
          %v290 = vadd.f32 %v245, %v287
          %v291 = vadd.f32 %v282, 1.0
          %v292 = vadd.f32 %v283, 1.0
          %v293 = vadd.f32 %v284, 1.0
          %294 = vrot.lane.b32.xlu0 %v254, 1
          %v295 = vpop.permute.xlu0 %294
          %296 = vrot.lane.b32.xlu0 %v253, 1
          %v297 = vpop.permute.xlu0 %296
          %298 = vrot.lane.b32.xlu0 %v252, 1
          %v299 = vpop.permute.xlu0 %298
          %v300 = vsub.f32 %v243, %v295
          %v301 = vsub.f32 %v244, %v297
          %v302 = vsub.f32 %v245, %v299
          %v303 = vmul.f32 %v300, %v300
          %v304 = vmul.f32 %v301, %v301
          %v305 = vmul.f32 %v302, %v302
          %v306 = vmul.f32 %v303, -18.0
          %v307 = vmul.f32 %v304, -18.0
          %v308 = vmul.f32 %v305, -18.0
          %v309 = vmul.f32 %v306, 1.442695
          %v310 = vpow.pop %v309
          %v311 = vmul.f32 %v307, 1.442695
          %v312 = vpow.pop %v311
          %v313 = vmul.f32 %v308, 1.442695
          %v314 = vpow.pop %v313
          %vm315 = vcmp.lt.f32.partialorder %v310, 0.20888568
          %vm316 = vcmp.lt.f32.partialorder %v312, 0.20888568
          %vm317 = vcmp.lt.f32.partialorder %v314, 0.20888568
          %v318 = vmul.f32 %v310, 0.1
          %v319 = vmul.f32 %v312, 0.1
          %v320 = vmul.f32 %v314, 0.1
          %v321 = vsel %vm315, %v318, %v310
          %v322 = vsel %vm316, %v319, %v312
          %v323 = vsel %vm317, %v320, %v314
          %v324 = vmul.f32 %v321, %v295
          %v325 = vmul.f32 %v322, %v297
          %v326 = vmul.f32 %v323, %v299
          %v327 = vadd.f32 %v288, %v324
          %v328 = vadd.f32 %v289, %v325
          %v329 = vadd.f32 %v290, %v326
          %v330 = vadd.f32 %v291, %v321
          %v331 = vadd.f32 %v292, %v322
          %v332 = vadd.f32 %v293, %v323
          %v333 = vsub.f32 %v243, %v254
          %v334 = vsub.f32 %v244, %v253
          %v335 = vsub.f32 %v245, %v252
          %v336 = vmul.f32 %v333, %v333
          %v337 = vmul.f32 %v334, %v334
          %v338 = vmul.f32 %v335, %v335
          %v339 = vmul.f32 %v336, -18.0
          %v340 = vmul.f32 %v337, -18.0
          %v341 = vmul.f32 %v338, -18.0
          %v342 = vmul.f32 %v339, 1.442695
          %v343 = vpow.pop %v342
          %v344 = vmul.f32 %v340, 1.442695
          %v345 = vpow.pop %v344
          %v346 = vmul.f32 %v341, 1.442695
          %v347 = vpow.pop %v346
          %vm348 = vcmp.lt.f32.partialorder %v343, 0.20888568
          %vm349 = vcmp.lt.f32.partialorder %v345, 0.20888568
          %vm350 = vcmp.lt.f32.partialorder %v347, 0.20888568
          %v351 = vmul.f32 %v343, 0.1
          %v352 = vmul.f32 %v345, 0.1
          %v353 = vmul.f32 %v347, 0.1
          %v354 = vsel %vm348, %v351, %v343
          %v355 = vsel %vm349, %v352, %v345
          %v356 = vsel %vm350, %v353, %v347
          %v357 = vmul.f32 %v354, %v254
          %v358 = vmul.f32 %v355, %v253
          %v359 = vmul.f32 %v356, %v252
          %v360 = vadd.f32 %v327, %v357
          %v361 = vadd.f32 %v328, %v358
          %v362 = vadd.f32 %v329, %v359
          %v363 = vadd.f32 %v330, %v354
          %v364 = vadd.f32 %v331, %v355
          %v365 = vadd.f32 %v332, %v356
          %366 = vrot.lane.b32.xlu0 %v254, 127
          %v367 = vpop.permute.xlu0 %366
          %368 = vrot.lane.b32.xlu0 %v253, 127
          %v369 = vpop.permute.xlu0 %368
          %370 = vrot.lane.b32.xlu0 %v252, 127
          %v371 = vpop.permute.xlu0 %370
          %v372 = vsub.f32 %v243, %v367
          %v373 = vsub.f32 %v244, %v369
          %v374 = vsub.f32 %v245, %v371
          %v375 = vmul.f32 %v372, %v372
          %v376 = vmul.f32 %v373, %v373
          %v377 = vmul.f32 %v374, %v374
          %v378 = vmul.f32 %v375, -18.0
          %v379 = vmul.f32 %v376, -18.0
          %v380 = vmul.f32 %v377, -18.0
          %v381 = vmul.f32 %v378, 1.442695
          %v382 = vpow.pop %v381
          %v383 = vmul.f32 %v379, 1.442695
          %v384 = vpow.pop %v383
          %v385 = vmul.f32 %v380, 1.442695
          %v386 = vpow.pop %v385
          %vm387 = vcmp.lt.f32.partialorder %v382, 0.20888568
          %vm388 = vcmp.lt.f32.partialorder %v384, 0.20888568
          %vm389 = vcmp.lt.f32.partialorder %v386, 0.20888568
          %v390 = vmul.f32 %v382, 0.1
          %v391 = vmul.f32 %v384, 0.1
          %v392 = vmul.f32 %v386, 0.1
          %v393 = vsel %vm387, %v390, %v382
          %v394 = vsel %vm388, %v391, %v384
          %v395 = vsel %vm389, %v392, %v386
          %v396 = vmul.f32 %v393, %v367
          %v397 = vmul.f32 %v394, %v369
          %v398 = vmul.f32 %v395, %v371
          %v399 = vadd.f32 %v360, %v396
          %v400 = vadd.f32 %v361, %v397
          %v401 = vadd.f32 %v362, %v398
          %v402 = vadd.f32 %v363, %v393
          %v403 = vadd.f32 %v364, %v394
          %v404 = vadd.f32 %v365, %v395
          %405 = vrot.lane.b32.xlu0 %v254, 126
          %v406 = vpop.permute.xlu0 %405
          %407 = vrot.lane.b32.xlu0 %v253, 126
          %v408 = vpop.permute.xlu0 %407
          %409 = vrot.lane.b32.xlu0 %v252, 126
          %v410 = vpop.permute.xlu0 %409
          %v411 = vsub.f32 %v243, %v406
          %v412 = vsub.f32 %v244, %v408
          %v413 = vsub.f32 %v245, %v410
          %v414 = vmul.f32 %v411, %v411
          %v415 = vmul.f32 %v412, %v412
          %v416 = vmul.f32 %v413, %v413
          %v417 = vmul.f32 %v414, -18.0
          %v418 = vmul.f32 %v415, -18.0
          %v419 = vmul.f32 %v416, -18.0
          %v420 = vmul.f32 %v417, 1.442695
          %v421 = vpow.pop %v420
          %v422 = vmul.f32 %v418, 1.442695
          %v423 = vpow.pop %v422
          %v424 = vmul.f32 %v419, 1.442695
          %v425 = vpow.pop %v424
          %vm426 = vcmp.lt.f32.partialorder %v421, 0.20888568
          %vm427 = vcmp.lt.f32.partialorder %v423, 0.20888568
          %vm428 = vcmp.lt.f32.partialorder %v425, 0.20888568
          %v429 = vmul.f32 %v421, 0.1
          %v430 = vmul.f32 %v423, 0.1
          %v431 = vmul.f32 %v425, 0.1
          %v432 = vsel %vm426, %v429, %v421
          %v433 = vsel %vm427, %v430, %v423
          %v434 = vsel %vm428, %v431, %v425
          %v435 = vmul.f32 %v432, %v406
          %v436 = vmul.f32 %v433, %v408
          %v437 = vmul.f32 %v434, %v410
          %v438 = vadd.f32 %v399, %v435
          %v439 = vadd.f32 %v400, %v436
          %v440 = vadd.f32 %v401, %v437
          %v441 = vadd.f32 %v402, %v432
          %v442 = vadd.f32 %v403, %v433
          %v443 = vadd.f32 %v404, %v434
          %v444 = vrot.slane %v243, 7
          %v445 = vrot.slane %v244, 7
          %v446 = vrot.slane %v245, 7
          %vm447 = vcmp.lt.s32.totalorder %v250, 1
          %v448 = vsel %vm447, %v445, %v446
          %v449 = vsel %vm447, %v444, %v445
          %v450 = vsel %vm447, %v446, %v444
          %451 = vrot.lane.b32.xlu0 %v450, 2
          %v452 = vpop.permute.xlu0 %451
          %453 = vrot.lane.b32.xlu0 %v449, 2
          %v454 = vpop.permute.xlu0 %453
          %455 = vrot.lane.b32.xlu0 %v448, 2
          %v456 = vpop.permute.xlu0 %455
          %v457 = vsub.f32 %v243, %v452
          %v458 = vsub.f32 %v244, %v454
          %v459 = vsub.f32 %v245, %v456
          %v460 = vmul.f32 %v457, %v457
          %v461 = vmul.f32 %v458, %v458
          %v462 = vmul.f32 %v459, %v459
          %v463 = vmul.f32 %v460, -18.0
          %v464 = vmul.f32 %v461, -18.0
          %v465 = vmul.f32 %v462, -18.0
          %v466 = vmul.f32 %v463, 1.442695
          %v467 = vpow.pop %v466
          %v468 = vmul.f32 %v464, 1.442695
          %v469 = vpow.pop %v468
          %v470 = vmul.f32 %v465, 1.442695
          %v471 = vpow.pop %v470
          %vm472 = vcmp.lt.f32.partialorder %v467, 0.20888568
          %vm473 = vcmp.lt.f32.partialorder %v469, 0.20888568
          %vm474 = vcmp.lt.f32.partialorder %v471, 0.20888568
          %v475 = vmul.f32 %v467, 0.1
          %v476 = vmul.f32 %v469, 0.1
          %v477 = vmul.f32 %v471, 0.1
          %v478 = vsel %vm472, %v475, %v467
          %v479 = vsel %vm473, %v476, %v469
          %v480 = vsel %vm474, %v477, %v471
          %v481 = vmul.f32 %v478, %v452
          %v482 = vmul.f32 %v479, %v454
          %v483 = vmul.f32 %v480, %v456
          %v484 = vadd.f32 %v438, %v481
          %v485 = vadd.f32 %v439, %v482
          %v486 = vadd.f32 %v440, %v483
          %v487 = vadd.f32 %v441, %v478
          %v488 = vadd.f32 %v442, %v479
          %v489 = vadd.f32 %v443, %v480
          %490 = vrot.lane.b32.xlu0 %v450, 1
          %v491 = vpop.permute.xlu0 %490
          %492 = vrot.lane.b32.xlu0 %v449, 1
          %v493 = vpop.permute.xlu0 %492
          %494 = vrot.lane.b32.xlu0 %v448, 1
          %v495 = vpop.permute.xlu0 %494
          %v496 = vsub.f32 %v243, %v491
          %v497 = vsub.f32 %v244, %v493
          %v498 = vsub.f32 %v245, %v495
          %v499 = vmul.f32 %v496, %v496
          %v500 = vmul.f32 %v497, %v497
          %v501 = vmul.f32 %v498, %v498
          %v502 = vmul.f32 %v499, -18.0
          %v503 = vmul.f32 %v500, -18.0
          %v504 = vmul.f32 %v501, -18.0
          %v505 = vmul.f32 %v502, 1.442695
          %v506 = vpow.pop %v505
          %v507 = vmul.f32 %v503, 1.442695
          %v508 = vpow.pop %v507
          %v509 = vmul.f32 %v504, 1.442695
          %v510 = vpow.pop %v509
          %vm511 = vcmp.lt.f32.partialorder %v506, 0.20888568
          %vm512 = vcmp.lt.f32.partialorder %v508, 0.20888568
          %vm513 = vcmp.lt.f32.partialorder %v510, 0.20888568
          %v514 = vmul.f32 %v506, 0.1
          %v515 = vmul.f32 %v508, 0.1
          %v516 = vmul.f32 %v510, 0.1
          %v517 = vsel %vm511, %v514, %v506
          %v518 = vsel %vm512, %v515, %v508
          %v519 = vsel %vm513, %v516, %v510
          %v520 = vmul.f32 %v517, %v491
          %v521 = vmul.f32 %v518, %v493
          %v522 = vmul.f32 %v519, %v495
          %v523 = vadd.f32 %v484, %v520
          %v524 = vadd.f32 %v485, %v521
          %v525 = vadd.f32 %v486, %v522
          %v526 = vadd.f32 %v487, %v517
          %v527 = vadd.f32 %v488, %v518
          %v528 = vadd.f32 %v489, %v519
          %v529 = vsub.f32 %v243, %v450
          %v530 = vsub.f32 %v244, %v449
          %v531 = vsub.f32 %v245, %v448
          %v532 = vmul.f32 %v529, %v529
          %v533 = vmul.f32 %v530, %v530
          %v534 = vmul.f32 %v531, %v531
          %v535 = vmul.f32 %v532, -18.0
          %v536 = vmul.f32 %v533, -18.0
          %v537 = vmul.f32 %v534, -18.0
          %v538 = vmul.f32 %v535, 1.442695
          %v539 = vpow.pop %v538
          %v540 = vmul.f32 %v536, 1.442695
          %v541 = vpow.pop %v540
          %v542 = vmul.f32 %v537, 1.442695
          %v543 = vpow.pop %v542
          %vm544 = vcmp.lt.f32.partialorder %v539, 0.20888568
          %vm545 = vcmp.lt.f32.partialorder %v541, 0.20888568
          %vm546 = vcmp.lt.f32.partialorder %v543, 0.20888568
          %v547 = vmul.f32 %v539, 0.1
          %v548 = vmul.f32 %v541, 0.1
          %v549 = vmul.f32 %v543, 0.1
          %v550 = vsel %vm544, %v547, %v539
          %v551 = vsel %vm545, %v548, %v541
          %v552 = vsel %vm546, %v549, %v543
          %v553 = vmul.f32 %v550, %v450
          %v554 = vmul.f32 %v551, %v449
          %v555 = vmul.f32 %v552, %v448
          %v556 = vadd.f32 %v523, %v553
          %v557 = vadd.f32 %v524, %v554
          %v558 = vadd.f32 %v525, %v555
          %v559 = vadd.f32 %v526, %v550
          %v560 = vadd.f32 %v527, %v551
          %v561 = vadd.f32 %v528, %v552
          %562 = vrot.lane.b32.xlu0 %v450, 127
          %v563 = vpop.permute.xlu0 %562
          %564 = vrot.lane.b32.xlu0 %v449, 127
          %v565 = vpop.permute.xlu0 %564
          %566 = vrot.lane.b32.xlu0 %v448, 127
          %v567 = vpop.permute.xlu0 %566
          %v568 = vsub.f32 %v243, %v563
          %v569 = vsub.f32 %v244, %v565
          %v570 = vsub.f32 %v245, %v567
          %v571 = vmul.f32 %v568, %v568
          %v572 = vmul.f32 %v569, %v569
          %v573 = vmul.f32 %v570, %v570
          %v574 = vmul.f32 %v571, -18.0
          %v575 = vmul.f32 %v572, -18.0
          %v576 = vmul.f32 %v573, -18.0
          %v577 = vmul.f32 %v574, 1.442695
          %v578 = vpow.pop %v577
          %v579 = vmul.f32 %v575, 1.442695
          %v580 = vpow.pop %v579
          %v581 = vmul.f32 %v576, 1.442695
          %v582 = vpow.pop %v581
          %vm583 = vcmp.lt.f32.partialorder %v578, 0.20888568
          %vm584 = vcmp.lt.f32.partialorder %v580, 0.20888568
          %vm585 = vcmp.lt.f32.partialorder %v582, 0.20888568
          %v586 = vmul.f32 %v578, 0.1
          %v587 = vmul.f32 %v580, 0.1
          %v588 = vmul.f32 %v582, 0.1
          %v589 = vsel %vm583, %v586, %v578
          %v590 = vsel %vm584, %v587, %v580
          %v591 = vsel %vm585, %v588, %v582
          %v592 = vmul.f32 %v589, %v563
          %v593 = vmul.f32 %v590, %v565
          %v594 = vmul.f32 %v591, %v567
          %v595 = vadd.f32 %v556, %v592
          %v596 = vadd.f32 %v557, %v593
          %v597 = vadd.f32 %v558, %v594
          %v598 = vadd.f32 %v559, %v589
          %v599 = vadd.f32 %v560, %v590
          %v600 = vadd.f32 %v561, %v591
          %601 = vrot.lane.b32.xlu0 %v450, 126
          %v602 = vpop.permute.xlu0 %601
          %603 = vrot.lane.b32.xlu0 %v449, 126
          %v604 = vpop.permute.xlu0 %603
          %605 = vrot.lane.b32.xlu0 %v448, 126
          %v606 = vpop.permute.xlu0 %605
          %v607 = vsub.f32 %v243, %v602
          %v608 = vsub.f32 %v244, %v604
          %v609 = vsub.f32 %v245, %v606
          %v610 = vmul.f32 %v607, %v607
          %v611 = vmul.f32 %v608, %v608
          %v612 = vmul.f32 %v609, %v609
          %v613 = vmul.f32 %v610, -18.0
          %v614 = vmul.f32 %v611, -18.0
          %v615 = vmul.f32 %v612, -18.0
          %v616 = vmul.f32 %v613, 1.442695
          %v617 = vpow.pop %v616
          %v618 = vmul.f32 %v614, 1.442695
          %v619 = vpow.pop %v618
          %v620 = vmul.f32 %v615, 1.442695
          %v621 = vpow.pop %v620
          %vm622 = vcmp.lt.f32.partialorder %v617, 0.20888568
          %vm623 = vcmp.lt.f32.partialorder %v619, 0.20888568
          %vm624 = vcmp.lt.f32.partialorder %v621, 0.20888568
          %v625 = vmul.f32 %v617, 0.1
          %v626 = vmul.f32 %v619, 0.1
          %v627 = vmul.f32 %v621, 0.1
          %v628 = vsel %vm622, %v625, %v617
          %v629 = vsel %vm623, %v626, %v619
          %v630 = vsel %vm624, %v627, %v621
          %v631 = vmul.f32 %v628, %v602
          %v632 = vmul.f32 %v629, %v604
          %v633 = vmul.f32 %v630, %v606
          %v634 = vadd.f32 %v595, %v631
          %v635 = vadd.f32 %v596, %v632
          %v636 = vadd.f32 %v597, %v633
          %v637 = vadd.f32 %v598, %v628
          %v638 = vadd.f32 %v599, %v629
          %v639 = vadd.f32 %v600, %v630
          %640 = vrot.lane.b32.xlu0 %v243, 2
          %v641 = vpop.permute.xlu0 %640
          %642 = vrot.lane.b32.xlu0 %v244, 2
          %v643 = vpop.permute.xlu0 %642
          %644 = vrot.lane.b32.xlu0 %v245, 2
          %v645 = vpop.permute.xlu0 %644
          %v646 = vsub.f32 %v243, %v641
          %v647 = vsub.f32 %v244, %v643
          %v648 = vsub.f32 %v245, %v645
          %v649 = vmul.f32 %v646, %v646
          %v650 = vmul.f32 %v647, %v647
          %v651 = vmul.f32 %v648, %v648
          %v652 = vmul.f32 %v649, -18.0
          %v653 = vmul.f32 %v650, -18.0
          %v654 = vmul.f32 %v651, -18.0
          %v655 = vmul.f32 %v652, 1.442695
          %v656 = vpow.pop %v655
          %v657 = vmul.f32 %v653, 1.442695
          %v658 = vpow.pop %v657
          %v659 = vmul.f32 %v654, 1.442695
          %v660 = vpow.pop %v659
          %vm661 = vcmp.lt.f32.partialorder %v656, 0.20888568
          %vm662 = vcmp.lt.f32.partialorder %v658, 0.20888568
          %vm663 = vcmp.lt.f32.partialorder %v660, 0.20888568
          %v664 = vmul.f32 %v656, 0.1
          %v665 = vmul.f32 %v658, 0.1
          %v666 = vmul.f32 %v660, 0.1
          %v667 = vsel %vm661, %v664, %v656
          %v668 = vsel %vm662, %v665, %v658
          %v669 = vsel %vm663, %v666, %v660
          %v670 = vmul.f32 %v667, %v641
          %v671 = vmul.f32 %v668, %v643
          %v672 = vmul.f32 %v669, %v645
          %v673 = vadd.f32 %v634, %v670
          %v674 = vadd.f32 %v635, %v671
          %v675 = vadd.f32 %v636, %v672
          %v676 = vadd.f32 %v637, %v667
          %v677 = vadd.f32 %v638, %v668
          %v678 = vadd.f32 %v639, %v669
          %679 = vrot.lane.b32.xlu0 %v243, 1
          %v680 = vpop.permute.xlu0 %679
          %681 = vrot.lane.b32.xlu0 %v244, 1
          %v682 = vpop.permute.xlu0 %681
          %683 = vrot.lane.b32.xlu0 %v245, 1
          %v684 = vpop.permute.xlu0 %683
          %v685 = vsub.f32 %v243, %v680
          %v686 = vsub.f32 %v244, %v682
          %v687 = vsub.f32 %v245, %v684
          %v688 = vmul.f32 %v685, %v685
          %v689 = vmul.f32 %v686, %v686
          %v690 = vmul.f32 %v687, %v687
          %v691 = vmul.f32 %v688, -18.0
          %v692 = vmul.f32 %v689, -18.0
          %v693 = vmul.f32 %v690, -18.0
          %v694 = vmul.f32 %v691, 1.442695
          %v695 = vpow.pop %v694
          %v696 = vmul.f32 %v692, 1.442695
          %v697 = vpow.pop %v696
          %v698 = vmul.f32 %v693, 1.442695
          %v699 = vpow.pop %v698
          %vm700 = vcmp.lt.f32.partialorder %v695, 0.20888568
          %vm701 = vcmp.lt.f32.partialorder %v697, 0.20888568
          %vm702 = vcmp.lt.f32.partialorder %v699, 0.20888568
          %v703 = vmul.f32 %v695, 0.1
          %v704 = vmul.f32 %v697, 0.1
          %v705 = vmul.f32 %v699, 0.1
          %v706 = vsel %vm700, %v703, %v695
          %v707 = vsel %vm701, %v704, %v697
          %v708 = vsel %vm702, %v705, %v699
          %v709 = vmul.f32 %v706, %v680
          %v710 = vmul.f32 %v707, %v682
          %v711 = vmul.f32 %v708, %v684
          %v712 = vadd.f32 %v673, %v709
          %v713 = vadd.f32 %v674, %v710
          %v714 = vadd.f32 %v675, %v711
          %v715 = vadd.f32 %v676, %v706
          %v716 = vadd.f32 %v677, %v707
          %v717 = vadd.f32 %v678, %v708
          %718 = vrot.lane.b32.xlu0 %v243, 127
          %v719 = vpop.permute.xlu0 %718
          %720 = vrot.lane.b32.xlu0 %v244, 127
          %v721 = vpop.permute.xlu0 %720
          %722 = vrot.lane.b32.xlu0 %v245, 127
          %v723 = vpop.permute.xlu0 %722
          %v724 = vsub.f32 %v243, %v719
          %v725 = vsub.f32 %v244, %v721
          %v726 = vsub.f32 %v245, %v723
          %v727 = vmul.f32 %v724, %v724
          %v728 = vmul.f32 %v725, %v725
          %v729 = vmul.f32 %v726, %v726
          %v730 = vmul.f32 %v727, -18.0
          %v731 = vmul.f32 %v728, -18.0
          %v732 = vmul.f32 %v729, -18.0
          %v733 = vmul.f32 %v730, 1.442695
          %v734 = vpow.pop %v733
          %v735 = vmul.f32 %v731, 1.442695
          %v736 = vpow.pop %v735
          %v737 = vmul.f32 %v732, 1.442695
          %v738 = vpow.pop %v737
          %vm739 = vcmp.lt.f32.partialorder %v734, 0.20888568
          %vm740 = vcmp.lt.f32.partialorder %v736, 0.20888568
          %vm741 = vcmp.lt.f32.partialorder %v738, 0.20888568
          %v742 = vmul.f32 %v734, 0.1
          %v743 = vmul.f32 %v736, 0.1
          %v744 = vmul.f32 %v738, 0.1
          %v745 = vsel %vm739, %v742, %v734
          %v746 = vsel %vm740, %v743, %v736
          %v747 = vsel %vm741, %v744, %v738
          %v748 = vmul.f32 %v745, %v719
          %v749 = vmul.f32 %v746, %v721
          %v750 = vmul.f32 %v747, %v723
          %v751 = vadd.f32 %v712, %v748
          %v752 = vadd.f32 %v713, %v749
          %v753 = vadd.f32 %v714, %v750
          %v754 = vadd.f32 %v715, %v745
          %v755 = vadd.f32 %v716, %v746
          %v756 = vadd.f32 %v717, %v747
          %757 = vrot.lane.b32.xlu0 %v243, 126
          %v758 = vpop.permute.xlu0 %757
          %759 = vrot.lane.b32.xlu0 %v244, 126
          %v760 = vpop.permute.xlu0 %759
          %761 = vrot.lane.b32.xlu0 %v245, 126
          %v762 = vpop.permute.xlu0 %761
          %v763 = vsub.f32 %v243, %v758
          %v764 = vsub.f32 %v244, %v760
          %v765 = vsub.f32 %v245, %v762
          %v766 = vmul.f32 %v763, %v763
          %v767 = vmul.f32 %v764, %v764
          %v768 = vmul.f32 %v765, %v765
          %v769 = vmul.f32 %v766, -18.0
          %v770 = vmul.f32 %v767, -18.0
          %v771 = vmul.f32 %v768, -18.0
          %v772 = vmul.f32 %v769, 1.442695
          %v773 = vpow.pop %v772
          %v774 = vmul.f32 %v770, 1.442695
          %v775 = vpow.pop %v774
          %v776 = vmul.f32 %v771, 1.442695
          %v777 = vpow.pop %v776
          %vm778 = vcmp.lt.f32.partialorder %v773, 0.20888568
          %vm779 = vcmp.lt.f32.partialorder %v775, 0.20888568
          %vm780 = vcmp.lt.f32.partialorder %v777, 0.20888568
          %v781 = vmul.f32 %v773, 0.1
          %v782 = vmul.f32 %v775, 0.1
          %v783 = vmul.f32 %v777, 0.1
          %v784 = vsel %vm778, %v781, %v773
          %v785 = vsel %vm779, %v782, %v775
          %v786 = vsel %vm780, %v783, %v777
          %v787 = vmul.f32 %v784, %v758
          %v788 = vmul.f32 %v785, %v760
          %v789 = vmul.f32 %v786, %v762
          %v790 = vadd.f32 %v751, %v787
          %v791 = vadd.f32 %v752, %v788
          %v792 = vadd.f32 %v753, %v789
          %v793 = vadd.f32 %v754, %v784
          %v794 = vadd.f32 %v755, %v785
          %v795 = vadd.f32 %v756, %v786
          %v796 = vrot.slane %v243, 1
          %v797 = vrot.slane %v244, 1
          %v798 = vrot.slane %v245, 1
          %vm799 = vcmp.lt.s32.totalorder %v250, 7
          %v800 = vsel %vm799, %v797, %v798
          %v801 = vsel %vm799, %v796, %v797
          %v802 = vsel %vm799, %v798, %v796
          %803 = vrot.lane.b32.xlu0 %v801, 2
          %v804 = vpop.permute.xlu0 %803
          %805 = vrot.lane.b32.xlu0 %v800, 2
          %v806 = vpop.permute.xlu0 %805
          %807 = vrot.lane.b32.xlu0 %v802, 2
          %v808 = vpop.permute.xlu0 %807
          %v809 = vsub.f32 %v243, %v804
          %v810 = vsub.f32 %v244, %v806
          %v811 = vsub.f32 %v245, %v808
          %v812 = vmul.f32 %v809, %v809
          %v813 = vmul.f32 %v810, %v810
          %v814 = vmul.f32 %v811, %v811
          %v815 = vmul.f32 %v812, -18.0
          %v816 = vmul.f32 %v813, -18.0
          %v817 = vmul.f32 %v814, -18.0
          %v818 = vmul.f32 %v815, 1.442695
          %v819 = vpow.pop %v818
          %v820 = vmul.f32 %v816, 1.442695
          %v821 = vpow.pop %v820
          %v822 = vmul.f32 %v817, 1.442695
          %v823 = vpow.pop %v822
          %vm824 = vcmp.lt.f32.partialorder %v819, 0.20888568
          %vm825 = vcmp.lt.f32.partialorder %v821, 0.20888568
          %vm826 = vcmp.lt.f32.partialorder %v823, 0.20888568
          %v827 = vmul.f32 %v819, 0.1
          %v828 = vmul.f32 %v821, 0.1
          %v829 = vmul.f32 %v823, 0.1
          %v830 = vsel %vm824, %v827, %v819
          %v831 = vsel %vm825, %v828, %v821
          %v832 = vsel %vm826, %v829, %v823
          %v833 = vmul.f32 %v830, %v804
          %v834 = vmul.f32 %v831, %v806
          %v835 = vmul.f32 %v832, %v808
          %v836 = vadd.f32 %v790, %v833
          %v837 = vadd.f32 %v791, %v834
          %v838 = vadd.f32 %v792, %v835
          %v839 = vadd.f32 %v793, %v830
          %v840 = vadd.f32 %v794, %v831
          %v841 = vadd.f32 %v795, %v832
          %842 = vrot.lane.b32.xlu0 %v801, 1
          %v843 = vpop.permute.xlu0 %842
          %844 = vrot.lane.b32.xlu0 %v800, 1
          %v845 = vpop.permute.xlu0 %844
          %846 = vrot.lane.b32.xlu0 %v802, 1
          %v847 = vpop.permute.xlu0 %846
          %v848 = vsub.f32 %v243, %v843
          %v849 = vsub.f32 %v244, %v845
          %v850 = vsub.f32 %v245, %v847
          %v851 = vmul.f32 %v848, %v848
          %v852 = vmul.f32 %v849, %v849
          %v853 = vmul.f32 %v850, %v850
          %v854 = vmul.f32 %v851, -18.0
          %v855 = vmul.f32 %v852, -18.0
          %v856 = vmul.f32 %v853, -18.0
          %v857 = vmul.f32 %v854, 1.442695
          %v858 = vpow.pop %v857
          %v859 = vmul.f32 %v855, 1.442695
          %v860 = vpow.pop %v859
          %v861 = vmul.f32 %v856, 1.442695
          %v862 = vpow.pop %v861
          %vm863 = vcmp.lt.f32.partialorder %v858, 0.20888568
          %vm864 = vcmp.lt.f32.partialorder %v860, 0.20888568
          %vm865 = vcmp.lt.f32.partialorder %v862, 0.20888568
          %v866 = vmul.f32 %v858, 0.1
          %v867 = vmul.f32 %v860, 0.1
          %v868 = vmul.f32 %v862, 0.1
          %v869 = vsel %vm863, %v866, %v858
          %v870 = vsel %vm864, %v867, %v860
          %v871 = vsel %vm865, %v868, %v862
          %v872 = vmul.f32 %v869, %v843
          %v873 = vmul.f32 %v870, %v845
          %v874 = vmul.f32 %v871, %v847
          %v875 = vadd.f32 %v836, %v872
          %v876 = vadd.f32 %v837, %v873
          %v877 = vadd.f32 %v838, %v874
          %v878 = vadd.f32 %v839, %v869
          %v879 = vadd.f32 %v840, %v870
          %v880 = vadd.f32 %v841, %v871
          %v881 = vsub.f32 %v243, %v801
          %v882 = vsub.f32 %v244, %v800
          %v883 = vsub.f32 %v245, %v802
          %v884 = vmul.f32 %v881, %v881
          %v885 = vmul.f32 %v882, %v882
          %v886 = vmul.f32 %v883, %v883
          %v887 = vmul.f32 %v884, -18.0
          %v888 = vmul.f32 %v885, -18.0
          %v889 = vmul.f32 %v886, -18.0
          %v890 = vmul.f32 %v887, 1.442695
          %v891 = vpow.pop %v890
          %v892 = vmul.f32 %v888, 1.442695
          %v893 = vpow.pop %v892
          %v894 = vmul.f32 %v889, 1.442695
          %v895 = vpow.pop %v894
          %vm896 = vcmp.lt.f32.partialorder %v891, 0.20888568
          %vm897 = vcmp.lt.f32.partialorder %v893, 0.20888568
          %vm898 = vcmp.lt.f32.partialorder %v895, 0.20888568
          %v899 = vmul.f32 %v891, 0.1
          %v900 = vmul.f32 %v893, 0.1
          %v901 = vmul.f32 %v895, 0.1
          %v902 = vsel %vm896, %v899, %v891
          %v903 = vsel %vm897, %v900, %v893
          %v904 = vsel %vm898, %v901, %v895
          %v905 = vmul.f32 %v902, %v801
          %v906 = vmul.f32 %v903, %v800
          %v907 = vmul.f32 %v904, %v802
          %v908 = vadd.f32 %v875, %v905
          %v909 = vadd.f32 %v876, %v906
          %v910 = vadd.f32 %v877, %v907
          %v911 = vadd.f32 %v878, %v902
          %v912 = vadd.f32 %v879, %v903
          %v913 = vadd.f32 %v880, %v904
          %914 = vrot.lane.b32.xlu0 %v801, 127
          %v915 = vpop.permute.xlu0 %914
          %916 = vrot.lane.b32.xlu0 %v800, 127
          %v917 = vpop.permute.xlu0 %916
          %918 = vrot.lane.b32.xlu0 %v802, 127
          %v919 = vpop.permute.xlu0 %918
          %v920 = vsub.f32 %v243, %v915
          %v921 = vsub.f32 %v244, %v917
          %v922 = vsub.f32 %v245, %v919
          %v923 = vmul.f32 %v920, %v920
          %v924 = vmul.f32 %v921, %v921
          %v925 = vmul.f32 %v922, %v922
          %v926 = vmul.f32 %v923, -18.0
          %v927 = vmul.f32 %v924, -18.0
          %v928 = vmul.f32 %v925, -18.0
          %v929 = vmul.f32 %v926, 1.442695
          %v930 = vpow.pop %v929
          %v931 = vmul.f32 %v927, 1.442695
          %v932 = vpow.pop %v931
          %v933 = vmul.f32 %v928, 1.442695
          %v934 = vpow.pop %v933
          %vm935 = vcmp.lt.f32.partialorder %v930, 0.20888568
          %vm936 = vcmp.lt.f32.partialorder %v932, 0.20888568
          %vm937 = vcmp.lt.f32.partialorder %v934, 0.20888568
          %v938 = vmul.f32 %v930, 0.1
          %v939 = vmul.f32 %v932, 0.1
          %v940 = vmul.f32 %v934, 0.1
          %v941 = vsel %vm935, %v938, %v930
          %v942 = vsel %vm936, %v939, %v932
          %v943 = vsel %vm937, %v940, %v934
          %v944 = vmul.f32 %v941, %v915
          %v945 = vmul.f32 %v942, %v917
          %v946 = vmul.f32 %v943, %v919
          %v947 = vadd.f32 %v908, %v944
          %v948 = vadd.f32 %v909, %v945
          %v949 = vadd.f32 %v910, %v946
          %v950 = vadd.f32 %v911, %v941
          %v951 = vadd.f32 %v912, %v942
          %v952 = vadd.f32 %v913, %v943
          %953 = vrot.lane.b32.xlu0 %v801, 126
          %v954 = vpop.permute.xlu0 %953
          %955 = vrot.lane.b32.xlu0 %v800, 126
          %v956 = vpop.permute.xlu0 %955
          %957 = vrot.lane.b32.xlu0 %v802, 126
          %v958 = vpop.permute.xlu0 %957
          %v959 = vsub.f32 %v243, %v954
          %v960 = vsub.f32 %v244, %v956
          %v961 = vsub.f32 %v245, %v958
          %v962 = vmul.f32 %v959, %v959
          %v963 = vmul.f32 %v960, %v960
          %v964 = vmul.f32 %v961, %v961
          %v965 = vmul.f32 %v962, -18.0
          %v966 = vmul.f32 %v963, -18.0
          %v967 = vmul.f32 %v964, -18.0
          %v968 = vmul.f32 %v965, 1.442695
          %v969 = vpow.pop %v968
          %v970 = vmul.f32 %v966, 1.442695
          %v971 = vpow.pop %v970
          %v972 = vmul.f32 %v967, 1.442695
          %v973 = vpow.pop %v972
          %vm974 = vcmp.lt.f32.partialorder %v969, 0.20888568
          %vm975 = vcmp.lt.f32.partialorder %v971, 0.20888568
          %vm976 = vcmp.lt.f32.partialorder %v973, 0.20888568
          %v977 = vmul.f32 %v969, 0.1
          %v978 = vmul.f32 %v971, 0.1
          %v979 = vmul.f32 %v973, 0.1
          %v980 = vsel %vm974, %v977, %v969
          %v981 = vsel %vm975, %v978, %v971
          %v982 = vsel %vm976, %v979, %v973
          %v983 = vmul.f32 %v980, %v954
          %v984 = vmul.f32 %v981, %v956
          %v985 = vmul.f32 %v982, %v958
          %v986 = vadd.f32 %v947, %v983
          %v987 = vadd.f32 %v948, %v984
          %v988 = vadd.f32 %v949, %v985
          %v989 = vadd.f32 %v950, %v980
          %v990 = vadd.f32 %v951, %v981
          %v991 = vadd.f32 %v952, %v982
          %v992 = vrot.slane %v243, 2
          %v993 = vrot.slane %v244, 2
          %v994 = vrot.slane %v245, 2
          %vm995 = vcmp.lt.s32.totalorder %v250, 6
          %v996 = vsel %vm995, %v993, %v994
          %v997 = vsel %vm995, %v992, %v993
          %v998 = vsel %vm995, %v994, %v992
          %999 = vrot.lane.b32.xlu0 %v997, 2
          %v1000 = vpop.permute.xlu0 %999
          %1001 = vrot.lane.b32.xlu0 %v996, 2
          %v1002 = vpop.permute.xlu0 %1001
          %1003 = vrot.lane.b32.xlu0 %v998, 2
          %v1004 = vpop.permute.xlu0 %1003
          %v1005 = vsub.f32 %v243, %v1000
          %v1006 = vsub.f32 %v244, %v1002
          %v1007 = vsub.f32 %v245, %v1004
          %v1008 = vmul.f32 %v1005, %v1005
          %v1009 = vmul.f32 %v1006, %v1006
          %v1010 = vmul.f32 %v1007, %v1007
          %v1011 = vmul.f32 %v1008, -18.0
          %v1012 = vmul.f32 %v1009, -18.0
          %v1013 = vmul.f32 %v1010, -18.0
          %v1014 = vmul.f32 %v1011, 1.442695
          %v1015 = vpow.pop %v1014
          %v1016 = vmul.f32 %v1012, 1.442695
          %v1017 = vpow.pop %v1016
          %v1018 = vmul.f32 %v1013, 1.442695
          %v1019 = vpow.pop %v1018
          %vm1020 = vcmp.lt.f32.partialorder %v1015, 0.20888568
          %vm1021 = vcmp.lt.f32.partialorder %v1017, 0.20888568
          %vm1022 = vcmp.lt.f32.partialorder %v1019, 0.20888568
          %v1023 = vmul.f32 %v1015, 0.1
          %v1024 = vmul.f32 %v1017, 0.1
          %v1025 = vmul.f32 %v1019, 0.1
          %v1026 = vsel %vm1020, %v1023, %v1015
          %v1027 = vsel %vm1021, %v1024, %v1017
          %v1028 = vsel %vm1022, %v1025, %v1019
          %v1029 = vmul.f32 %v1026, %v1000
          %v1030 = vmul.f32 %v1027, %v1002
          %v1031 = vmul.f32 %v1028, %v1004
          %v1032 = vadd.f32 %v986, %v1029
          %v1033 = vadd.f32 %v987, %v1030
          %v1034 = vadd.f32 %v988, %v1031
          %v1035 = vadd.f32 %v989, %v1026
          %v1036 = vadd.f32 %v990, %v1027
          %v1037 = vadd.f32 %v991, %v1028
          %1038 = vrot.lane.b32.xlu0 %v997, 1
          %v1039 = vpop.permute.xlu0 %1038
          %1040 = vrot.lane.b32.xlu0 %v996, 1
          %v1041 = vpop.permute.xlu0 %1040
          %1042 = vrot.lane.b32.xlu0 %v998, 1
          %v1043 = vpop.permute.xlu0 %1042
          %v1044 = vsub.f32 %v243, %v1039
          %v1045 = vsub.f32 %v244, %v1041
          %v1046 = vsub.f32 %v245, %v1043
          %v1047 = vmul.f32 %v1044, %v1044
          %v1048 = vmul.f32 %v1045, %v1045
          %v1049 = vmul.f32 %v1046, %v1046
          %v1050 = vmul.f32 %v1047, -18.0
          %v1051 = vmul.f32 %v1048, -18.0
          %v1052 = vmul.f32 %v1049, -18.0
          %v1053 = vmul.f32 %v1050, 1.442695
          %v1054 = vpow.pop %v1053
          %v1055 = vmul.f32 %v1051, 1.442695
          %v1056 = vpow.pop %v1055
          %v1057 = vmul.f32 %v1052, 1.442695
          %v1058 = vpow.pop %v1057
          %vm1059 = vcmp.lt.f32.partialorder %v1054, 0.20888568
          %vm1060 = vcmp.lt.f32.partialorder %v1056, 0.20888568
          %vm1061 = vcmp.lt.f32.partialorder %v1058, 0.20888568
          %v1062 = vmul.f32 %v1054, 0.1
          %v1063 = vmul.f32 %v1056, 0.1
          %v1064 = vmul.f32 %v1058, 0.1
          %v1065 = vsel %vm1059, %v1062, %v1054
          %v1066 = vsel %vm1060, %v1063, %v1056
          %v1067 = vsel %vm1061, %v1064, %v1058
          %v1068 = vmul.f32 %v1065, %v1039
          %v1069 = vmul.f32 %v1066, %v1041
          %v1070 = vmul.f32 %v1067, %v1043
          %v1071 = vadd.f32 %v1032, %v1068
          %v1072 = vadd.f32 %v1033, %v1069
          %v1073 = vadd.f32 %v1034, %v1070
          %v1074 = vadd.f32 %v1035, %v1065
          %v1075 = vadd.f32 %v1036, %v1066
          %v1076 = vadd.f32 %v1037, %v1067
          %v1077 = vsub.f32 %v243, %v997
          %v1078 = vsub.f32 %v244, %v996
          %v1079 = vsub.f32 %v245, %v998
          %v1080 = vmul.f32 %v1077, %v1077
          %v1081 = vmul.f32 %v1078, %v1078
          %v1082 = vmul.f32 %v1079, %v1079
          %v1083 = vmul.f32 %v1080, -18.0
          %v1084 = vmul.f32 %v1081, -18.0
          %v1085 = vmul.f32 %v1082, -18.0
          %v1086 = vmul.f32 %v1083, 1.442695
          %v1087 = vpow.pop %v1086
          %v1088 = vmul.f32 %v1084, 1.442695
          %v1089 = vpow.pop %v1088
          %v1090 = vmul.f32 %v1085, 1.442695
          %v1091 = vpow.pop %v1090
          %vm1092 = vcmp.lt.f32.partialorder %v1087, 0.20888568
          %vm1093 = vcmp.lt.f32.partialorder %v1089, 0.20888568
          %vm1094 = vcmp.lt.f32.partialorder %v1091, 0.20888568
          %v1095 = vmul.f32 %v1087, 0.1
          %v1096 = vmul.f32 %v1089, 0.1
          %v1097 = vmul.f32 %v1091, 0.1
          %v1098 = vsel %vm1092, %v1095, %v1087
          %v1099 = vsel %vm1093, %v1096, %v1089
          %v1100 = vsel %vm1094, %v1097, %v1091
          %v1101 = vmul.f32 %v1098, %v997
          %v1102 = vmul.f32 %v1099, %v996
          %v1103 = vmul.f32 %v1100, %v998
          %v1104 = vadd.f32 %v1071, %v1101
          %v1105 = vadd.f32 %v1072, %v1102
          %v1106 = vadd.f32 %v1073, %v1103
          %v1107 = vadd.f32 %v1074, %v1098
          %v1108 = vadd.f32 %v1075, %v1099
          %v1109 = vadd.f32 %v1076, %v1100
          %1110 = vrot.lane.b32.xlu0 %v997, 127
          %v1111 = vpop.permute.xlu0 %1110
          %1112 = vrot.lane.b32.xlu0 %v996, 127
          %v1113 = vpop.permute.xlu0 %1112
          %1114 = vrot.lane.b32.xlu0 %v998, 127
          %v1115 = vpop.permute.xlu0 %1114
          %v1116 = vsub.f32 %v243, %v1111
          %v1117 = vsub.f32 %v244, %v1113
          %v1118 = vsub.f32 %v245, %v1115
          %v1119 = vmul.f32 %v1116, %v1116
          %v1120 = vmul.f32 %v1117, %v1117
          %v1121 = vmul.f32 %v1118, %v1118
          %v1122 = vmul.f32 %v1119, -18.0
          %v1123 = vmul.f32 %v1120, -18.0
          %v1124 = vmul.f32 %v1121, -18.0
          %v1125 = vmul.f32 %v1122, 1.442695
          %v1126 = vpow.pop %v1125
          %v1127 = vmul.f32 %v1123, 1.442695
          %v1128 = vpow.pop %v1127
          %v1129 = vmul.f32 %v1124, 1.442695
          %v1130 = vpow.pop %v1129
          %vm1131 = vcmp.lt.f32.partialorder %v1126, 0.20888568
          %vm1132 = vcmp.lt.f32.partialorder %v1128, 0.20888568
          %vm1133 = vcmp.lt.f32.partialorder %v1130, 0.20888568
          %v1134 = vmul.f32 %v1126, 0.1
          %v1135 = vmul.f32 %v1128, 0.1
          %v1136 = vmul.f32 %v1130, 0.1
          %v1137 = vsel %vm1131, %v1134, %v1126
          %v1138 = vsel %vm1132, %v1135, %v1128
          %v1139 = vsel %vm1133, %v1136, %v1130
          %v1140 = vmul.f32 %v1137, %v1111
          %v1141 = vmul.f32 %v1138, %v1113
          %v1142 = vmul.f32 %v1139, %v1115
          %v1143 = vadd.f32 %v1104, %v1140
          %v1144 = vadd.f32 %v1105, %v1141
          %v1145 = vadd.f32 %v1106, %v1142
          %v1146 = vadd.f32 %v1107, %v1137
          %v1147 = vadd.f32 %v1108, %v1138
          %v1148 = vadd.f32 %v1109, %v1139
          %1149 = vrot.lane.b32.xlu0 %v997, 126
          %v1150 = vpop.permute.xlu0 %1149
          %1151 = vrot.lane.b32.xlu0 %v996, 126
          %v1152 = vpop.permute.xlu0 %1151
          %1153 = vrot.lane.b32.xlu0 %v998, 126
          %v1154 = vpop.permute.xlu0 %1153
          %v1155 = vsub.f32 %v243, %v1150
          %v1156 = vsub.f32 %v244, %v1152
          %v1157 = vsub.f32 %v245, %v1154
          %v1158 = vmul.f32 %v1155, %v1155
          %v1159 = vmul.f32 %v1156, %v1156
          %v1160 = vmul.f32 %v1157, %v1157
          %v1161 = vmul.f32 %v1158, -18.0
          %v1162 = vmul.f32 %v1159, -18.0
          %v1163 = vmul.f32 %v1160, -18.0
          %v1164 = vmul.f32 %v1161, 1.442695
          %v1165 = vpow.pop %v1164
          %v1166 = vmul.f32 %v1162, 1.442695
          %v1167 = vpow.pop %v1166
          %v1168 = vmul.f32 %v1163, 1.442695
          %v1169 = vpow.pop %v1168
          %vm1170 = vcmp.lt.f32.partialorder %v1165, 0.20888568
          %vm1171 = vcmp.lt.f32.partialorder %v1167, 0.20888568
          %vm1172 = vcmp.lt.f32.partialorder %v1169, 0.20888568
          %v1173 = vmul.f32 %v1165, 0.1
          %v1174 = vmul.f32 %v1167, 0.1
          %v1175 = vmul.f32 %v1169, 0.1
          %v1176 = vsel %vm1170, %v1173, %v1165
          %v1177 = vsel %vm1171, %v1174, %v1167
          %v1178 = vsel %vm1172, %v1175, %v1169
          %v1179 = vmul.f32 %v1176, %v1150
          %v1180 = vmul.f32 %v1177, %v1152
          %v1181 = vmul.f32 %v1178, %v1154
          %v1182 = vadd.f32 %v1143, %v1179
          %v1183 = vadd.f32 %v1144, %v1180
          %v1184 = vadd.f32 %v1145, %v1181
          %v1185 = vadd.f32 %v1146, %v1176
          %v1186 = vadd.f32 %v1147, %v1177
          %v1187 = vadd.f32 %v1148, %v1178
          %v1188 = vrcp.pop %v1185
          %v1189 = vmul.f32 %v1185, %v1188
          %v1190 = vsub.f32 1.0, %v1189
          %v1191 = vmul.f32 %v1188, %v1190
          %v1192 = vadd.f32 %v1188, %v1191
          %vm1193 = vweird.f32 %v1185
          %vm1194 = vweird.f32 %v1188
          %vm1195 = vmor %vm1193, %vm1194
          %v1196 = vsel %vm1195, %v1188, %v1192
          %v1197 = vand.u32 2147483647, %v1185
          %vm1198 = vcmp.eq.f32.partialorder %v1197, 8.507059e+37
          %v1199 = vand.u32 %v1185, 2147483648
          %v1200 = vor.u32 1.1754944e-38, %v1199
          %v1201 = vsel %vm1198, %v1200, %v1196
          %v1202 = vmul.f32 %v1182, %v1201
          %v1203 = vrcp.pop %v1186
          %v1204 = vmul.f32 %v1186, %v1203
          %v1205 = vsub.f32 1.0, %v1204
          %v1206 = vmul.f32 %v1203, %v1205
          %v1207 = vadd.f32 %v1203, %v1206
          %vm1208 = vweird.f32 %v1186
          %vm1209 = vweird.f32 %v1203
          %vm1210 = vmor %vm1208, %vm1209
          %v1211 = vsel %vm1210, %v1203, %v1207
          %v1212 = vand.u32 2147483647, %v1186
          %vm1213 = vcmp.eq.f32.partialorder %v1212, 8.507059e+37
          %v1214 = vand.u32 %v1186, 2147483648
          %v1215 = vor.u32 1.1754944e-38, %v1214
          %v1216 = vsel %vm1213, %v1215, %v1211
          %v1217 = vmul.f32 %v1183, %v1216
          %v1218 = vrcp.pop %v1187
          %v1219 = vmul.f32 %v1187, %v1218
          %v1220 = vsub.f32 1.0, %v1219
          %v1221 = vmul.f32 %v1218, %v1220
          %v1222 = vadd.f32 %v1218, %v1221
          %vm1223 = vweird.f32 %v1187
          %vm1224 = vweird.f32 %v1218
          %vm1225 = vmor %vm1223, %vm1224
          %v1226 = vsel %vm1225, %v1218, %v1222
          %v1227 = vand.u32 2147483647, %v1187
          %vm1228 = vcmp.eq.f32.partialorder %v1227, 8.507059e+37
          %v1229 = vand.u32 %v1187, 2147483648
          %v1230 = vor.u32 1.1754944e-38, %v1229
          %v1231 = vsel %vm1228, %v1230, %v1226
          %v1232 = vmul.f32 %v1184, %v1231
          %1233 = vst [vmem:[#allocation2] sm:$0xff] %v1202
          %1234 = vst [vmem:[#allocation2 + $0x8] sm:$0xff] %v1217
          %1235 = vst [vmem:[#allocation2 + $0x10] sm:$0xff] %v1232
        $region33: #{tpu_custom_call.1} parent=23 // loop_footer
          %s192 = sadd.s32 1, %s188
        $region34: #{tpu_custom_call.1} parent=23 // loop_footer_branch
          %187 = sbr.rel target = $region30
        $region35: #{tpu_custom_call.1} parent=23 // loop_exit
          _
        %v1236 = vld [vmem:[#allocation2] sm:$0xff]
        %v1237 = vld [vmem:[#allocation2 + $0x8] sm:$0xff]
        %v1238 = vld [vmem:[#allocation2 + $0x10] sm:$0xff]
        %1239 = vst [vmem:[%s167] sm:$0xff] %v1236
        %1240 = vst [vmem:[%s167 + $0x8] sm:$0xff] %v1237
        %1241 = vst [vmem:[%s167 + $0x10] sm:$0xff] %v1238
        %v1242 = vrcp.pop 0.51
        %v1243 = vmul.f32 0.51, %v1242
        %v1244 = vsub.f32 1.0, %v1243
        %v1245 = vmul.f32 %v1242, %v1244
        %v1246 = vadd.f32 %v1242, %v1245
        %vm1247 = vweird.f32 %v1242
        %v1248 = vsel %vm1247, %v1242, %v1246
        %v1249 = vmul.f32 %v1236, %v1248
        %v1250 = vmul.f32 %v1237, %v1248
        %v1251 = vmul.f32 %v1238, %v1248
        %v1252 = vcvt.f32.s32.ties.to.even %v1249
        %v1253 = vcvt.f32.s32.ties.to.even %v1250
        %v1254 = vcvt.f32.s32.ties.to.even %v1251
        %1255 = vst [vmem:[%s174] sm:$0xff] %v1252
        %1256 = vst [vmem:[%s174 + $0x8] sm:$0xff] %v1253
        %1257 = vst [vmem:[%s174 + $0x10] sm:$0xff] %v1254
        %s1258 = sand.u32 %s57, 1
        %s1259 = scalar_lea.sflag [#allocation5], %s1258
        %s1260 = sand.u32 %s57, 1
        %s1261 = smul.addr %s1260, 24
        %s1262 = scalar_lea.vmem [#allocation6], %s1261
        %s1263 = sand.u32 %s83, 1
        %s1264 = scalar_lea.sflag [#allocation8], %s1263
        %s1265 = sand.u32 %s83, 1
        %s1266 = smul.addr %s1265, 24
        %s1267 = scalar_lea.vmem [#allocation7], %s1266
        // Predicated region
        $region36: #{tpu_custom_call.1} parent=23 // pred_check
          %p1268 = pneg %p67
        $region37: #{tpu_custom_call.1} parent=23 // pred_check_branch
          %1270 = sbr.rel (%p1268) target = $region39
        $region38: #{tpu_custom_call.1} parent=23 // pred_region
          %s1271 = smul.u32 3, %s23
          %1273 = vsyncadd %s1259, 0
          %s1274 = smul.addr %s1271, 8
          %s1275 = scalar_lea.hbm %s1, %s1274
          %s1276 = sshll.u32 %s1262, 4
          %s1277 = int_to_ptr.vmem [resolvable:$true] %s1276
          %s1278 = sshll.u32 %s1275, 4
          %s1279 = int_to_ptr.hbm [resolvable:$true] %s1278
          %1284 = dma.vmem_to_hbm [thread:$0]  %s1277, 384, %s1279, %s1259, 128, 128, 8
        $region39: #{tpu_custom_call.1} parent=23 // pred_fallthru
          _
        // Predicated region
        $region40: #{tpu_custom_call.1} parent=23 // pred_check
          %p1285 = pneg %p93
        $region41: #{tpu_custom_call.1} parent=23 // pred_check_branch
          %1287 = sbr.rel (%p1285) target = $region43
        $region42: #{tpu_custom_call.1} parent=23 // pred_region
          %s1288 = smul.u32 3, %s23
          %1290 = vsyncadd %s1264, 0
          %s1291 = smul.addr %s1288, 8
          %s1292 = scalar_lea.hbm %s2, %s1291
          %s1293 = sshll.u32 %s1267, 4
          %s1294 = int_to_ptr.vmem [resolvable:$true] %s1293
          %s1295 = sshll.u32 %s1292, 4
          %s1296 = int_to_ptr.hbm [resolvable:$true] %s1295
          %1301 = dma.vmem_to_hbm [thread:$0]  %s1294, 384, %s1296, %s1264, 128, 128, 8
        $region43: #{tpu_custom_call.1} parent=23 // pred_fallthru
          _
      $region24: #{tpu_custom_call.1} parent=5 // pred_fallthru
        _
      %p1302 = scmp.le.s32.totalorder 2, %s18
      // Predicated region
      $region44: #{tpu_custom_call.1} parent=5 // pred_check
        %p1303 = pneg %p1302
      $region45: #{tpu_custom_call.1} parent=5 // pred_check_branch
        %1305 = sbr.rel (%p1303) target = $region47
      $region46: #{tpu_custom_call.1} parent=5 // pred_region
        %s1306 = ssub.s32 %s18, 2
        // Predicated region
        $region48: #{tpu_custom_call.1} parent=46 // pred_check
          %p1307 = pneg %p73
        $region49: #{tpu_custom_call.1} parent=46 // pred_check_branch
          %1309 = sbr.rel (%p1307) target = $region51
        $region50: #{tpu_custom_call.1} parent=46 // pred_region
          %s1310 = sand.u32 %s58, 1
          %s1311 = scalar_lea.sflag [#allocation5], %s1310
          %s1312 = sand.u32 %s58, 1
          %s1313 = smul.addr %s1312, 24
          %s1314 = scalar_lea.vmem [#allocation6], %s1313
          %1316 = dma.done %s1311, 384
        $region51: #{tpu_custom_call.1} parent=46 // pred_fallthru
          _
        // Predicated region
        $region52: #{tpu_custom_call.1} parent=46 // pred_check
          %p1317 = pneg %p99
        $region53: #{tpu_custom_call.1} parent=46 // pred_check_branch
          %1319 = sbr.rel (%p1317) target = $region55
        $region54: #{tpu_custom_call.1} parent=46 // pred_region
          %s1320 = sand.u32 %s84, 1
          %s1321 = scalar_lea.sflag [#allocation8], %s1320
          %s1322 = sand.u32 %s84, 1
          %s1323 = smul.addr %s1322, 24
          %s1324 = scalar_lea.vmem [#allocation7], %s1323
          %1326 = dma.done %s1321, 384
        $region55: #{tpu_custom_call.1} parent=46 // pred_fallthru
          _
      $region47: #{tpu_custom_call.1} parent=5 // pred_fallthru
        _
    $region6: #{tpu_custom_call.1} parent=1 // loop_footer
      %s22 = sadd.s32 1, %s18
    $region7: #{tpu_custom_call.1} parent=1 // loop_footer_branch
      %17 = sbr.rel target = $region3
    $region8: #{tpu_custom_call.1} parent=1 // loop_exit
      _
    %1327 = vsyncpa [#allocation4], 1
    %s1328 = scalar_lea.sflag [#allocation4], 1
    %1329 = vsyncpa %s1328, 1
    %1330 = vsyncpa [#allocation5], 1
    %s1331 = scalar_lea.sflag [#allocation5], 1
    %1332 = vsyncpa %s1331, 1
    %1333 = vsyncpa [#allocation8], 1
    %s1334 = scalar_lea.sflag [#allocation8], 1
    %1335 = vsyncpa %s1334, 1

</llo_original>
